<compile_context>
chip_gen: v7x
topology: tpu7x:2x2x1
jax: 0.10.0
libtpu: 0.0.40
codegen_flags: <defaults>
</compile_context>

<pallas_src>
import functools

import jax
import jax.numpy as jnp
from jax import lax
from jax.experimental import pallas as pl
from jax.experimental.pallas import tpu as pltpu


def _cross_attention_kernel(x_ref, y_ref, wq_ref, wkv_ref, wo_ref, b_ref,
                            o_ref, q_sc, m_sc, l_sc, acc_sc,
                            *, e_pad, bt, tq, tk, sk):
    ki = pl.program_id(2)
    nk = pl.num_programs(2)

    bias = b_ref[...]            # (8, Ep) f32: rows = [bq, bk, bv, bo, 0...]
    bq = bias[0:1, :]
    bk = bias[1:2, :]
    bv = bias[2:3, :]
    bo = bias[3:4, :]

    @pl.when(ki == 0)
    def _():
        # Q projection once per (batch-block, q-tile); reused across k tiles.
        # Scale 1/sqrt(E) is pre-folded into Wq / bq by the wrapper.
        x2 = x_ref[...].reshape(bt * tq, e_pad)                      # bf16
        q = jnp.dot(x2, wq_ref[...],
                    preferred_element_type=jnp.float32) + bq
        q_sc[...] = q.reshape(bt, tq, e_pad).astype(jnp.bfloat16)
        m_sc[...] = jnp.full_like(m_sc, -jnp.inf)
        l_sc[...] = jnp.zeros_like(l_sc)
        acc_sc[...] = jnp.zeros_like(acc_sc)

    # K/V projection for this key tile; [Wk | Wv] fused -> one wide MXU matmul.
    y2 = y_ref[...].reshape(bt * tk, e_pad)                          # bf16
    kv = jnp.dot(y2, wkv_ref[...], preferred_element_type=jnp.float32)
    k = (kv[:, :e_pad] + bk).reshape(bt, tk, e_pad).astype(jnp.bfloat16)
    v = (kv[:, e_pad:] + bv).reshape(bt, tk, e_pad).astype(jnp.bfloat16)

    # Q @ K^T via contraction over the embedding dim: no materialized k.T.
    s = jnp.einsum("bqd,bkd->bqk", q_sc[...], k,
                   preferred_element_type=jnp.float32)               # (BT,TQ,TK)

    # Mask padded key positions (tail tile when Sk is not a TK multiple).
    col = lax.broadcasted_iota(jnp.int32, s.shape, 2) + ki * tk
    s = jnp.where(col < sk, s, -jnp.inf)

    # Online (flash-style) softmax update.
    m_prev = m_sc[...]
    m_new = jnp.maximum(m_prev, jnp.max(s, axis=-1, keepdims=True))
    alpha = jnp.exp(m_prev - m_new)
    p = jnp.exp(s - m_new)
    l_sc[...] = alpha * l_sc[...] + jnp.sum(p, axis=-1, keepdims=True)
    acc_sc[...] = alpha * acc_sc[...] + jnp.einsum(
        "bqk,bkd->bqd", p.astype(jnp.bfloat16), v,
        preferred_element_type=jnp.float32)
    m_sc[...] = m_new

    # TODO(synk): nn.Dropout(0.1) is identity in eval mode; training-mode
    # dropout (pltpu.prng_seed + pltpu.prng_random_bits mask on p) not applied.

    @pl.when(ki == nk - 1)
    def _():
        ctx = acc_sc[...] * pl.reciprocal(l_sc[...], approx=True)    # (BT,TQ,Ep)
        ctx2 = ctx.reshape(bt * tq, e_pad).astype(jnp.bfloat16)
        out = jnp.dot(ctx2, wo_ref[...],
                      preferred_element_type=jnp.float32) + bo
        o_ref[...] = out.reshape(bt, tq, e_pad).astype(o_ref.dtype)


def cross_attention(x, y, params, *, lane_align=256, max_tq=256, max_tk=512,
                    target_mxu_rows=256):
    """x: (B, Sq, E), y: (B, Sk, E). params: dict of weights/biases."""
    B, Sq, E = x.shape
    _, Sk, _ = y.shape

    # Lane dim padded to a 256 multiple (fills the 2x256 MXU on v6e/v7x;
    # harmless on v5e's 4x128 MXU).
    Ep = ((E + lane_align - 1) // lane_align) * lane_align

    def seq_tile(s, tmax):
        if s <= tmax:
            t = ((s + 7) // 8) * 8          # sublane aligned
            return t, t
        t = tmax
        return t, ((s + t - 1) // t) * t

    TQ, Sq_pad = seq_tile(Sq, max_tq)
    TK, Sk_pad = seq_tile(Sk, max_tk)

    # Batch tile: pack several batch elements per grid step so the projection
    # matmuls feed ~target_mxu_rows rows into the MXU even when Sq is tiny.
    bt_cap = max(1, target_mxu_rows // TQ)
    BT = 1
    for cand in range(min(B, bt_cap), 0, -1):
        if B % cand == 0:
            BT = cand
            break

    scale = 1.0 / (float(E) ** 0.5)   # uses the ORIGINAL embedding dim

    def pad_w(w):
        return jnp.pad(w, ((0, Ep - w.shape[0]), (0, Ep - w.shape[1])))

    # bf16 weights (halves weight DMA bytes and hits the bf16-native MXU).
    wq = pad_w(params["wq"] * scale).astype(jnp.bfloat16)            # (Ep, Ep)
    wkv = jnp.concatenate([pad_w(params["wk"]), pad_w(params["wv"])],
                          axis=1).astype(jnp.bfloat16)               # (Ep, 2Ep)
    wo = pad_w(params["wo"]).astype(jnp.bfloat16)                    # (Ep, Ep)

    # All biases packed in one (8, Ep) f32 tile -> single DMA descriptor.
    biases = jnp.zeros((8, Ep), jnp.float32)
    biases = biases.at[0, :E].set(params["bq"] * scale)
    biases = biases.at[1, :E].set(params["bk"])
    biases = biases.at[2, :E].set(params["bv"])
    biases = biases.at[3, :E].set(params["bo"])

    # Activations: zero-pad seq + lane dims, cast to bf16 (halves DMA bytes).
    x_p = jnp.pad(x, ((0, 0), (0, Sq_pad - Sq), (0, Ep - E))).astype(jnp.bfloat16)
    y_p = jnp.pad(y, ((0, 0), (0, Sk_pad - Sk), (0, Ep - E))).astype(jnp.bfloat16)

    grid = (B // BT, Sq_pad // TQ, Sk_pad // TK)

    kernel = functools.partial(
        _cross_attention_kernel,
        e_pad=Ep, bt=BT, tq=TQ, tk=TK, sk=Sk)

    # VMEM budget (v7x-safe, 64 MiB physical / 32 MiB scoped default):
    # double-buffered in/out blocks + resident bf16 weights + scratch + headroom.
    w_bytes = (wq.size + wkv.size + wo.size) * 2 + biases.size * 4
    blk_bytes = (BT * TQ * Ep + BT * TK * Ep) * 2 + BT * TQ * Ep * 4
    scratch_bytes = BT * TQ * Ep * (2 + 4) + 2 * BT * TQ * 4
    vmem_limit = int(2 * (w_bytes + blk_bytes) + scratch_bytes + (16 << 20))

    flops = 2 * B * (2 * Sq * E * E + 2 * Sk * E * E + 2 * Sq * Sk * E)
    bytes_accessed = (x_p.size * 2 + y_p.size * 2 + B * Sq_pad * Ep * 4
                      + w_bytes)
    cost = pl.CostEstimate(flops=int(flops),
                           transcendentals=int(B * Sq * Sk),
                           bytes_accessed=int(bytes_accessed))

    out_p = pl.pallas_call(
        kernel,
        out_shape=jax.ShapeDtypeStruct((B, Sq_pad, Ep), jnp.float32),
        grid_spec=pltpu.PrefetchScalarGridSpec(
            num_scalar_prefetch=0,
            grid=grid,
            in_specs=[
                pl.BlockSpec((BT, TQ, Ep), lambda b, qi, ki: (b, qi, 0)),  # x
                pl.BlockSpec((BT, TK, Ep), lambda b, qi, ki: (b, ki, 0)),  # y
                pl.BlockSpec((Ep, Ep), lambda b, qi, ki: (0, 0)),          # Wq*scale
                pl.BlockSpec((Ep, 2 * Ep), lambda b, qi, ki: (0, 0)),      # [Wk|Wv]
                pl.BlockSpec((Ep, Ep), lambda b, qi, ki: (0, 0)),          # Wo
                pl.BlockSpec((8, Ep), lambda b, qi, ki: (0, 0)),           # biases
            ],
            out_specs=pl.BlockSpec((BT, TQ, Ep), lambda b, qi, ki: (b, qi, 0)),
            scratch_shapes=[
                pltpu.VMEM((BT, TQ, Ep), jnp.bfloat16),   # cached scaled Q
                pltpu.VMEM((BT, TQ, 1), jnp.float32),     # running max
                pltpu.VMEM((BT, TQ, 1), jnp.float32),     # running denom
                pltpu.VMEM((BT, TQ, Ep), jnp.float32),    # output accumulator
            ],
        ),
        compiler_params=pltpu.CompilerParams(
            dimension_semantics=("parallel", "parallel", "arbitrary"),
            vmem_limit_bytes=vmem_limit,
        ),
        cost_estimate=cost,
    )(x_p, y_p, wq, wkv, wo, biases)

    # Drop padded query rows and embedding columns.
    return out_p[:, :Sq, :E]


def make_params(key, embedding_dim):
    """Deterministic synthetic Linear params (stored as (E_in, E_out))."""
    keys = jax.random.split(key, 8)
    scale = 1.0 / (embedding_dim ** 0.5)

    def lin(kw, kb):
        w = jax.random.uniform(kw, (embedding_dim, embedding_dim),
                               jnp.float32, -scale, scale)
        b = jax.random.uniform(kb, (embedding_dim,), jnp.float32, -scale, scale)
        return w, b

    wq, bq = lin(keys[0], keys[1])
    wk, bk = lin(keys[2], keys[3])
    wv, bv = lin(keys[4], keys[5])
    wo, bo = lin(keys[6], keys[7])
    return dict(wq=wq, bq=bq, wk=wk, bk=bk, wv=wv, bv=bv, wo=wo, bo=bo)


def reference(x, y, p):
    q = x @ p["wq"] + p["bq"]
    k = y @ p["wk"] + p["bk"]
    v = y @ p["wv"] + p["bv"]
    e = x.shape[-1]
    s = jnp.einsum("bqe,bke->bqk", q, k) / (e ** 0.5)
    a = jax.nn.softmax(s, axis=-1)
    c = jnp.einsum("bqk,bke->bqe", a, v)
    return c @ p["wo"] + p["bo"]


if __name__ == "__main__":
    key = jax.random.PRNGKey(0)
    k_x, k_y, k_p = jax.random.split(key, 3)

    B, Sq, Sk, E = 2, 8, 8, 32
    x = jax.random.normal(k_x, (B, Sq, E), jnp.float32)
    y = jax.random.normal(k_y, (B, Sk, E), jnp.float32)
    params = make_params(k_p, E)

    out = cross_attention(x, y, params)
    out = jax.block_until_ready(out)

    ref = reference(x, y, params)
    assert out.shape == (B, Sq, E)
    # Tolerance relaxed vs. exact f32: MXU operands are bf16 (f32 accumulation)
    # and the softmax denominator uses the EUP approximate reciprocal.
    assert jnp.allclose(out, ref, atol=5e-2, rtol=5e-2), (
        f"max err {jnp.max(jnp.abs(out - ref))}")

    print("KERNEL_OK")
</pallas_src>

<mosaic_0001>
module attributes {stable_mosaic.version = 11 : i64} {
  func.func @_cross_attention_kernel(%arg0: i32, %arg1: i32, %arg2: i32, %arg3: memref<2x8x256xbf16, #tpu.memory_space<vmem>>, %arg4: memref<2x8x256xbf16, #tpu.memory_space<vmem>>, %arg5: memref<256x256xbf16, #tpu.memory_space<vmem>>, %arg6: memref<256x512xbf16, #tpu.memory_space<vmem>>, %arg7: memref<256x256xbf16, #tpu.memory_space<vmem>>, %arg8: memref<8x256xf32, #tpu.memory_space<vmem>>, %arg9: memref<2x8x256xf32, #tpu.memory_space<vmem>>, %arg10: memref<2x8x256xbf16, #tpu.memory_space<vmem>>, %arg11: memref<2x8x1xf32, #tpu.memory_space<vmem>>, %arg12: memref<2x8x1xf32, #tpu.memory_space<vmem>>, %arg13: memref<2x8x256xf32, #tpu.memory_space<vmem>>) attributes {dimension_semantics = [#tpu.dimension_semantics<parallel>, #tpu.dimension_semantics<parallel>, #tpu.dimension_semantics<arbitrary>], iteration_bounds = array<i64: 1, 1, 1>, scalar_prefetch = 0 : i64, scratch_operands = 4 : i64, tpu.core_type = #tpu.core_type<tc>, window_params = [{transform_indices = @transform_0, window_bounds = array<i64: 2, 8, 256>}, {transform_indices = @transform_1, window_bounds = array<i64: 2, 8, 256>}, {pipeline_mode = #tpu.pipeline_mode<synchronous>, transform_indices = @transform_2, window_bounds = array<i64: 256, 256>}, {pipeline_mode = #tpu.pipeline_mode<synchronous>, transform_indices = @transform_3, window_bounds = array<i64: 256, 512>}, {pipeline_mode = #tpu.pipeline_mode<synchronous>, transform_indices = @transform_4, window_bounds = array<i64: 256, 256>}, {pipeline_mode = #tpu.pipeline_mode<synchronous>, transform_indices = @transform_5, window_bounds = array<i64: 8, 256>}, {transform_indices = @transform_6, window_bounds = array<i64: 2, 8, 256>}]} {
    %c0 = arith.constant 0 : index
    %c0_0 = arith.constant 0 : index
    %0 = vector.load %arg8[%c0, %c0_0] : memref<8x256xf32, #tpu.memory_space<vmem>>, vector<8x256xf32>
    %1 = vector.extract_strided_slice %0 {offsets = [0, 0], sizes = [1, 256], strides = [1, 1]} : vector<8x256xf32> to vector<1x256xf32>
    %2 = vector.extract_strided_slice %0 {offsets = [1, 0], sizes = [1, 256], strides = [1, 1]} : vector<8x256xf32> to vector<1x256xf32>
    %3 = vector.extract_strided_slice %0 {offsets = [2, 0], sizes = [1, 256], strides = [1, 1]} : vector<8x256xf32> to vector<1x256xf32>
    %4 = vector.extract_strided_slice %0 {offsets = [3, 0], sizes = [1, 256], strides = [1, 1]} : vector<8x256xf32> to vector<1x256xf32>
    %c0_i32 = arith.constant 0 : i32
    %5 = arith.cmpi eq, %arg2, %c0_i32 : i32
    %6 = arith.extui %5 : i1 to i32
    %c0_i32_1 = arith.constant 0 : i32
    %7 = arith.cmpi ne, %6, %c0_i32_1 : i32
    scf.if %7 {
      %c0_36 = arith.constant 0 : index
      %c0_37 = arith.constant 0 : index
      %c0_38 = arith.constant 0 : index
      %58 = vector.load %arg3[%c0_36, %c0_37, %c0_38] : memref<2x8x256xbf16, #tpu.memory_space<vmem>>, vector<2x8x256xbf16>
      %59 = vector.shape_cast %58 : vector<2x8x256xbf16> to vector<16x256xbf16>
      %c0_39 = arith.constant 0 : index
      %c0_40 = arith.constant 0 : index
      %60 = vector.load %arg5[%c0_39, %c0_40] : memref<256x256xbf16, #tpu.memory_space<vmem>>, vector<256x256xbf16>
      %cst_41 = arith.constant dense<0.000000e+00> : vector<16x256xf32>
      %61 = tpu.matmul %59, %60, %cst_41 {dimension_numbers = #tpu.dot_dimension_numbers<[1], [0], [0], [1], [0, 0, 1, 1], [], []>} : vector<16x256xbf16>, vector<256x256xbf16>, vector<16x256xf32> -> vector<16x256xf32>
      %62 = vector.broadcast %1 : vector<1x256xf32> to vector<16x256xf32>
      %63 = arith.addf %61, %62 : vector<16x256xf32>
      %64 = vector.shape_cast %63 : vector<16x256xf32> to vector<2x8x256xf32>
      %65 = arith.truncf %64 : vector<2x8x256xf32> to vector<2x8x256xbf16>
      %c0_42 = arith.constant 0 : index
      %c0_43 = arith.constant 0 : index
      %c0_44 = arith.constant 0 : index
      %66 = vector.load %arg10[%c0_42, %c0_43, %c0_44] : memref<2x8x256xbf16, #tpu.memory_space<vmem>>, vector<2x8x256xbf16>
      tpu.vector_store %arg10[%c0_42, %c0_43, %c0_44], %65 {strides = array<i32>} : memref<2x8x256xbf16, #tpu.memory_space<vmem>>, vector<2x8x256xbf16>,
      %cst_45 = arith.constant 0xFF800000 : f32
      %67 = vector.broadcast %cst_45 : f32 to vector<2x8x1xf32>
      %c0_46 = arith.constant 0 : index
      %c0_47 = arith.constant 0 : index
      %c0_48 = arith.constant 0 : index
      %68 = vector.load %arg11[%c0_46, %c0_47, %c0_48] : memref<2x8x1xf32, #tpu.memory_space<vmem>>, vector<2x8x1xf32>
      tpu.vector_store %arg11[%c0_46, %c0_47, %c0_48], %67 {strides = array<i32>} : memref<2x8x1xf32, #tpu.memory_space<vmem>>, vector<2x8x1xf32>,
      %cst_49 = arith.constant 0.000000e+00 : f32
      %69 = vector.broadcast %cst_49 : f32 to vector<2x8x1xf32>
      %c0_50 = arith.constant 0 : index
      %c0_51 = arith.constant 0 : index
      %c0_52 = arith.constant 0 : index
      %70 = vector.load %arg12[%c0_50, %c0_51, %c0_52] : memref<2x8x1xf32, #tpu.memory_space<vmem>>, vector<2x8x1xf32>
      tpu.vector_store %arg12[%c0_50, %c0_51, %c0_52], %69 {strides = array<i32>} : memref<2x8x1xf32, #tpu.memory_space<vmem>>, vector<2x8x1xf32>,
      %cst_53 = arith.constant 0.000000e+00 : f32
      %71 = vector.broadcast %cst_53 : f32 to vector<2x8x256xf32>
      %c0_54 = arith.constant 0 : index
      %c0_55 = arith.constant 0 : index
      %c0_56 = arith.constant 0 : index
      %72 = vector.load %arg13[%c0_54, %c0_55, %c0_56] : memref<2x8x256xf32, #tpu.memory_space<vmem>>, vector<2x8x256xf32>
      tpu.vector_store %arg13[%c0_54, %c0_55, %c0_56], %71 {strides = array<i32>} : memref<2x8x256xf32, #tpu.memory_space<vmem>>, vector<2x8x256xf32>,
    } else {
    }
    %c0_2 = arith.constant 0 : index
    %c0_3 = arith.constant 0 : index
    %c0_4 = arith.constant 0 : index
    %8 = vector.load %arg4[%c0_2, %c0_3, %c0_4] : memref<2x8x256xbf16, #tpu.memory_space<vmem>>, vector<2x8x256xbf16>
    %9 = vector.shape_cast %8 : vector<2x8x256xbf16> to vector<16x256xbf16>
    %c0_5 = arith.constant 0 : index
    %c0_6 = arith.constant 0 : index
    %10 = vector.load %arg6[%c0_5, %c0_6] : memref<256x512xbf16, #tpu.memory_space<vmem>>, vector<256x512xbf16>
    %cst = arith.constant dense<0.000000e+00> : vector<16x512xf32>
    %11 = tpu.matmul %9, %10, %cst {dimension_numbers = #tpu.dot_dimension_numbers<[1], [0], [0], [1], [0, 0, 1, 1], [], []>} : vector<16x256xbf16>, vector<256x512xbf16>, vector<16x512xf32> -> vector<16x512xf32>
    %12 = vector.extract_strided_slice %11 {offsets = [0, 0], sizes = [16, 256], strides = [1, 1]} : vector<16x512xf32> to vector<16x256xf32>
    %13 = vector.broadcast %2 : vector<1x256xf32> to vector<16x256xf32>
    %14 = arith.addf %12, %13 : vector<16x256xf32>
    %15 = vector.shape_cast %14 : vector<16x256xf32> to vector<2x8x256xf32>
    %16 = arith.truncf %15 : vector<2x8x256xf32> to vector<2x8x256xbf16>
    %17 = vector.extract_strided_slice %11 {offsets = [0, 256], sizes = [16, 256], strides = [1, 1]} : vector<16x512xf32> to vector<16x256xf32>
    %18 = vector.broadcast %3 : vector<1x256xf32> to vector<16x256xf32>
    %19 = arith.addf %17, %18 : vector<16x256xf32>
    %20 = vector.shape_cast %19 : vector<16x256xf32> to vector<2x8x256xf32>
    %21 = arith.truncf %20 : vector<2x8x256xf32> to vector<2x8x256xbf16>
    %c0_7 = arith.constant 0 : index
    %c0_8 = arith.constant 0 : index
    %c0_9 = arith.constant 0 : index
    %22 = vector.load %arg10[%c0_7, %c0_8, %c0_9] : memref<2x8x256xbf16, #tpu.memory_space<vmem>>, vector<2x8x256xbf16>
    "tpu.trace_start"() <{level = 10 : i32, message = "bqd,bkd->bqk"}> : () -> ()
    %cst_10 = arith.constant dense<0.000000e+00> : vector<2x8x8xf32>
    %23 = tpu.matmul %22, %16, %cst_10 {dimension_numbers = #tpu.dot_dimension_numbers<[2], [2], [1], [1], [0, 0, 0, 1, 1, 1], [0], [0]>} : vector<2x8x256xbf16>, vector<2x8x256xbf16>, vector<2x8x8xf32> -> vector<2x8x8xf32>
    "tpu.trace_stop"() : () -> ()
    %24 = tpu.iota {dimensions = array<i32: 2>} : vector<2x8x8xi32>
    %c8_i32 = arith.constant 8 : i32
    %25 = arith.muli %arg2, %c8_i32 : i32
    %26 = vector.broadcast %25 : i32 to vector<2x8x8xi32>
    %27 = arith.addi %24, %26 : vector<2x8x8xi32>
    %c8_i32_11 = arith.constant 8 : i32
    %28 = vector.broadcast %c8_i32_11 : i32 to vector<2x8x8xi32>
    %29 = arith.cmpi slt, %27, %28 : vector<2x8x8xi32>
    %cst_12 = arith.constant 0xFF800000 : f32
    %30 = vector.broadcast %cst_12 : f32 to vector<2x8x8xf32>
    %31 = arith.select %29, %23, %30 : vector<2x8x8xi1>, vector<2x8x8xf32>
    %c0_13 = arith.constant 0 : index
    %c0_14 = arith.constant 0 : index
    %c0_15 = arith.constant 0 : index
    %32 = vector.load %arg11[%c0_13, %c0_14, %c0_15] : memref<2x8x1xf32, #tpu.memory_space<vmem>>, vector<2x8x1xf32>
    %cst_16 = arith.constant dense<0xFF800000> : vector<2x8xf32>
    %33 = vector.multi_reduction <maximumf>, %31, %cst_16 [2] : vector<2x8x8xf32> to vector<2x8xf32>
    %34 = vector.shape_cast %33 : vector<2x8xf32> to vector<2x8x1xf32>
    %35 = arith.maximumf %32, %34 : vector<2x8x1xf32>
    %36 = arith.subf %32, %35 : vector<2x8x1xf32>
    %37 = math.exp %36 : vector<2x8x1xf32>
    %38 = vector.broadcast %35 : vector<2x8x1xf32> to vector<2x8x8xf32>
    %39 = arith.subf %31, %38 : vector<2x8x8xf32>
    %40 = math.exp %39 : vector<2x8x8xf32>
    %c0_17 = arith.constant 0 : index
    %c0_18 = arith.constant 0 : index
    %c0_19 = arith.constant 0 : index
    %41 = vector.load %arg12[%c0_17, %c0_18, %c0_19] : memref<2x8x1xf32, #tpu.memory_space<vmem>>, vector<2x8x1xf32>
    %42 = arith.mulf %37, %41 : vector<2x8x1xf32>
    %cst_20 = arith.constant dense<0.000000e+00> : vector<2x8xf32>
    %43 = vector.multi_reduction <add>, %40, %cst_20 [2] : vector<2x8x8xf32> to vector<2x8xf32>
    %44 = vector.shape_cast %43 : vector<2x8xf32> to vector<2x8x1xf32>
    %45 = arith.addf %42, %44 : vector<2x8x1xf32>
    %c0_21 = arith.constant 0 : index
    %c0_22 = arith.constant 0 : index
    %c0_23 = arith.constant 0 : index
    %46 = vector.load %arg12[%c0_21, %c0_22, %c0_23] : memref<2x8x1xf32, #tpu.memory_space<vmem>>, vector<2x8x1xf32>
    tpu.vector_store %arg12[%c0_21, %c0_22, %c0_23], %45 {strides = array<i32>} : memref<2x8x1xf32, #tpu.memory_space<vmem>>, vector<2x8x1xf32>,
    %c0_24 = arith.constant 0 : index
    %c0_25 = arith.constant 0 : index
    %c0_26 = arith.constant 0 : index
    %47 = vector.load %arg13[%c0_24, %c0_25, %c0_26] : memref<2x8x256xf32, #tpu.memory_space<vmem>>, vector<2x8x256xf32>
    %48 = vector.broadcast %37 : vector<2x8x1xf32> to vector<2x8x256xf32>
    %49 = arith.mulf %48, %47 : vector<2x8x256xf32>
    %50 = arith.truncf %40 : vector<2x8x8xf32> to vector<2x8x8xbf16>
    "tpu.trace_start"() <{level = 10 : i32, message = "bqk,bkd->bqd"}> : () -> ()
    %cst_27 = arith.constant dense<0.000000e+00> : vector<2x8x256xf32>
    %51 = tpu.matmul %50, %21, %cst_27 {dimension_numbers = #tpu.dot_dimension_numbers<[2], [1], [1], [2], [0, 0, 0, 1, 1, 2], [0], [0]>} : vector<2x8x8xbf16>, vector<2x8x256xbf16>, vector<2x8x256xf32> -> vector<2x8x256xf32>
    "tpu.trace_stop"() : () -> ()
    %52 = arith.addf %49, %51 : vector<2x8x256xf32>
    %c0_28 = arith.constant 0 : index
    %c0_29 = arith.constant 0 : index
    %c0_30 = arith.constant 0 : index
    %53 = vector.load %arg13[%c0_28, %c0_29, %c0_30] : memref<2x8x256xf32, #tpu.memory_space<vmem>>, vector<2x8x256xf32>
    tpu.vector_store %arg13[%c0_28, %c0_29, %c0_30], %52 {strides = array<i32>} : memref<2x8x256xf32, #tpu.memory_space<vmem>>, vector<2x8x256xf32>,
    %c0_31 = arith.constant 0 : index
    %c0_32 = arith.constant 0 : index
    %c0_33 = arith.constant 0 : index
    %54 = vector.load %arg11[%c0_31, %c0_32, %c0_33] : memref<2x8x1xf32, #tpu.memory_space<vmem>>, vector<2x8x1xf32>
    tpu.vector_store %arg11[%c0_31, %c0_32, %c0_33], %35 {strides = array<i32>} : memref<2x8x1xf32, #tpu.memory_space<vmem>>, vector<2x8x1xf32>,
    %c0_i32_34 = arith.constant 0 : i32
    %55 = arith.cmpi eq, %arg2, %c0_i32_34 : i32
    %56 = arith.extui %55 : i1 to i32
    %c0_i32_35 = arith.constant 0 : i32
    %57 = arith.cmpi ne, %56, %c0_i32_35 : i32
    scf.if %57 {
      %c0_36 = arith.constant 0 : index
      %c0_37 = arith.constant 0 : index
      %c0_38 = arith.constant 0 : index
      %58 = vector.load %arg13[%c0_36, %c0_37, %c0_38] : memref<2x8x256xf32, #tpu.memory_space<vmem>>, vector<2x8x256xf32>
      %c0_39 = arith.constant 0 : index
      %c0_40 = arith.constant 0 : index
      %c0_41 = arith.constant 0 : index
      %59 = vector.load %arg12[%c0_39, %c0_40, %c0_41] : memref<2x8x1xf32, #tpu.memory_space<vmem>>, vector<2x8x1xf32>
      %60 = tpu.reciprocal %59 {approx = true} : vector<2x8x1xf32> -> vector<2x8x1xf32>
      %61 = vector.broadcast %60 : vector<2x8x1xf32> to vector<2x8x256xf32>
      %62 = arith.mulf %58, %61 : vector<2x8x256xf32>
      %63 = vector.shape_cast %62 : vector<2x8x256xf32> to vector<16x256xf32>
      %64 = arith.truncf %63 : vector<16x256xf32> to vector<16x256xbf16>
      %c0_42 = arith.constant 0 : index
      %c0_43 = arith.constant 0 : index
      %65 = vector.load %arg7[%c0_42, %c0_43] : memref<256x256xbf16, #tpu.memory_space<vmem>>, vector<256x256xbf16>
      %cst_44 = arith.constant dense<0.000000e+00> : vector<16x256xf32>
      %66 = tpu.matmul %64, %65, %cst_44 {dimension_numbers = #tpu.dot_dimension_numbers<[1], [0], [0], [1], [0, 0, 1, 1], [], []>} : vector<16x256xbf16>, vector<256x256xbf16>, vector<16x256xf32> -> vector<16x256xf32>
      %67 = vector.broadcast %4 : vector<1x256xf32> to vector<16x256xf32>
      %68 = arith.addf %66, %67 : vector<16x256xf32>
      %69 = vector.shape_cast %68 : vector<16x256xf32> to vector<2x8x256xf32>
      %c0_45 = arith.constant 0 : index
      %c0_46 = arith.constant 0 : index
      %c0_47 = arith.constant 0 : index
      %70 = vector.load %arg9[%c0_45, %c0_46, %c0_47] : memref<2x8x256xf32, #tpu.memory_space<vmem>>, vector<2x8x256xf32>
      tpu.vector_store %arg9[%c0_45, %c0_46, %c0_47], %69 {strides = array<i32>} : memref<2x8x256xf32, #tpu.memory_space<vmem>>, vector<2x8x256xf32>,
    } else {
    }
    return
  }
  func.func @transform_0(%arg0: i32, %arg1: i32, %arg2: i32) -> (i32, i32, i32) {
    %c0_i32 = arith.constant 0 : i32
    %c0_i32_0 = arith.constant 0 : i32
    return %arg0, %arg1, %c0_i32 : i32, i32, i32
  }
  func.func @transform_1(%arg0: i32, %arg1: i32, %arg2: i32) -> (i32, i32, i32) {
    %c0_i32 = arith.constant 0 : i32
    %c0_i32_0 = arith.constant 0 : i32
    return %arg0, %arg2, %c0_i32 : i32, i32, i32
  }
  func.func @transform_2(%arg0: i32, %arg1: i32, %arg2: i32) -> (i32, i32) {
    %c0_i32 = arith.constant 0 : i32
    %c0_i32_0 = arith.constant 0 : i32
    %c0_i32_1 = arith.constant 0 : i32
    return %c0_i32, %c0_i32_0 : i32, i32
  }
  func.func @transform_3(%arg0: i32, %arg1: i32, %arg2: i32) -> (i32, i32) {
    %c0_i32 = arith.constant 0 : i32
    %c0_i32_0 = arith.constant 0 : i32
    %c0_i32_1 = arith.constant 0 : i32
    return %c0_i32, %c0_i32_0 : i32, i32
  }
  func.func @transform_4(%arg0: i32, %arg1: i32, %arg2: i32) -> (i32, i32) {
    %c0_i32 = arith.constant 0 : i32
    %c0_i32_0 = arith.constant 0 : i32
    %c0_i32_1 = arith.constant 0 : i32
    return %c0_i32, %c0_i32_0 : i32, i32
  }
  func.func @transform_5(%arg0: i32, %arg1: i32, %arg2: i32) -> (i32, i32) {
    %c0_i32 = arith.constant 0 : i32
    %c0_i32_0 = arith.constant 0 : i32
    %c0_i32_1 = arith.constant 0 : i32
    return %c0_i32, %c0_i32_0 : i32, i32
  }
  func.func @transform_6(%arg0: i32, %arg1: i32, %arg2: i32) -> (i32, i32, i32) {
    %c0_i32 = arith.constant 0 : i32
    %c0_i32_0 = arith.constant 0 : i32
    return %arg0, %arg1, %c0_i32 : i32, i32, i32
  }
}

</mosaic_0001>

<llo_original>
// kernel: tpu_custom_call.1
$region0: #{tpu_custom_call.1}
  #allocation0 [shape = 'u32[]', space=smem, size = 0x4, offset = 0x4, fixed_abs, tag = 'smem constant byte address 0x4 - core index']
  #allocation1 [shape = 'u32[144,128]{1,0:T(1,128)}', space=vmem, size = 0x12000, scoped, tag = 'internal scratch']
  #allocation2 [shape = 'bf16[2,8,256]{2,1,0:T(8,128)(2,1)}', space=vmem, size = 0x2000, scoped, tag = 'scratch operand']
  #allocation3 [shape = 'f32[2,8,1]{2,1,0:T(8,128)}', space=vmem, size = 0x2000, scoped, tag = 'scratch operand']
  #allocation4 [shape = 'f32[2,8,1]{2,1,0:T(8,128)}', space=vmem, size = 0x2000, scoped, tag = 'scratch operand']
  #allocation5 [shape = 'f32[2,8,256]{2,1,0:T(8,128)}', space=vmem, size = 0x4000, scoped, tag = 'scratch operand']
  %s0 = inlined_call_operand.hbm [shape: bf16[2,8,256], index: 0, kind: input, shape index: {}]
  %s1 = inlined_call_operand.hbm [shape: bf16[2,8,256], index: 1, kind: input, shape index: {}]
  %s2 = inlined_call_operand.hbm [shape: bf16[256,256], index: 2, kind: input, shape index: {}]
  %s3 = inlined_call_operand.hbm [shape: bf16[256,512], index: 3, kind: input, shape index: {}]
  %s4 = inlined_call_operand.hbm [shape: bf16[256,256], index: 4, kind: input, shape index: {}]
  %s5 = inlined_call_operand.vmem [shape: f32[8,256], index: 5, kind: input, shape index: {}]
  %s6 = inlined_call_operand.hbm [shape: f32[2,8,256], index: 6, kind: output, shape index: {}]
  %s7 = sld [smem:[#allocation0]]
  $region62: #{tpu_custom_call.1} parent=0
    _
  %s9 = ssub.s32 1, %s7
  %s10 = scalar_select 0, %s9, %s7
  $region1: #{tpu_custom_call.1} parent=0
    #allocation6 [shape = 'u8[8192]{0}', space=vmem, size = 0x2000, scoped, tag = 'input window, operand 0, single buffered']
    #allocation7 [shape = 's32[1]{0}', space=sflag, size = 0x4, scoped, tag = 'scoped memory for tpu_custom_call.1']
    #allocation8 [shape = 's32[1]{0}', space=sflag, size = 0x4, scoped, tag = 'scoped memory for tpu_custom_call.1']
    #allocation9 [shape = 'u8[8192]{0}', space=vmem, size = 0x2000, scoped, tag = 'input window, operand 1, single buffered']
    #allocation10 [shape = 's32[1]{0}', space=sflag, size = 0x4, scoped, tag = 'scoped memory for tpu_custom_call.1']
    #allocation11 [shape = 'u8[131072]{0}', space=vmem, size = 0x20000, scoped, tag = 'input window, operand 2, single buffered']
    #allocation12 [shape = 'u8[262144]{0}', space=vmem, size = 0x40000, scoped, tag = 'input window, operand 3, single buffered']
    #allocation13 [shape = 's32[1]{0}', space=sflag, size = 0x4, scoped, tag = 'scoped memory for tpu_custom_call.1']
    #allocation14 [shape = 'u8[131072]{0}', space=vmem, size = 0x20000, scoped, tag = 'input window, operand 4, single buffered']
    #allocation15 [shape = 'u8[16384]{0}', space=vmem, size = 0x4000, scoped, tag = 'output window, operand 0, single buffered']
    %11 = vsyncpa [#allocation7], 0
    %12 = vsyncpa [#allocation10], 0
    %13 = vsyncpa [#allocation13], 0
    %14 = vsyncpa [#allocation8], 0
    // Predicated region
    $region2: #{tpu_custom_call.1} parent=1 // pred_check
      _
    $region3: #{tpu_custom_call.1} parent=1 // pred_check_branch
      %16 = sbr.rel (0) target = $region5
    $region4: #{tpu_custom_call.1} parent=1 // pred_region
      %s18 = ssub.s32 256, 256
      %19 = vsyncadd [#allocation7], %s18
      %s20 = sshll.u32 [#allocation6], 4
      %s21 = int_to_ptr.vmem [resolvable:$true] %s20
      %26 = dma.hbm_to_vmem [thread:$0]  %s0, 256, %s21, [#allocation7], 128, 128, 8
    $region5: #{tpu_custom_call.1} parent=1 // pred_fallthru
      _
    // Predicated region
    $region6: #{tpu_custom_call.1} parent=1 // pred_check
      _
    $region7: #{tpu_custom_call.1} parent=1 // pred_check_branch
      %28 = sbr.rel (0) target = $region9
    $region8: #{tpu_custom_call.1} parent=1 // pred_region
      %s30 = ssub.s32 256, 256
      %31 = vsyncadd [#allocation10], %s30
      %s32 = sshll.u32 [#allocation9], 4
      %s33 = int_to_ptr.vmem [resolvable:$true] %s32
      %38 = dma.hbm_to_vmem [thread:$0]  %s1, 256, %s33, [#allocation10], 128, 128, 8
    $region9: #{tpu_custom_call.1} parent=1 // pred_fallthru
      _
    // Predicated region
    $region10: #{tpu_custom_call.1} parent=1 // pred_check
      _
    $region11: #{tpu_custom_call.1} parent=1 // pred_check_branch
      %40 = sbr.rel (0) target = $region13
    $region12: #{tpu_custom_call.1} parent=1 // pred_region
      %s42 = ssub.s32 4096, 4096
      %43 = vsyncadd [#allocation10], %s42
      %s44 = sshll.u32 [#allocation11], 4
      %s45 = int_to_ptr.vmem [resolvable:$true] %s44
      %50 = dma.hbm_to_vmem [thread:$0]  %s2, 4096, %s45, [#allocation10], 128, 128, 8
    $region13: #{tpu_custom_call.1} parent=1 // pred_fallthru
      _
    // Predicated region
    $region14: #{tpu_custom_call.1} parent=1 // pred_check
      _
    $region15: #{tpu_custom_call.1} parent=1 // pred_check_branch
      %52 = sbr.rel (0) target = $region17
    $region16: #{tpu_custom_call.1} parent=1 // pred_region
      %s54 = ssub.s32 8192, 8192
      %55 = vsyncadd [#allocation13], %s54
      %s56 = sshll.u32 [#allocation12], 4
      %s57 = int_to_ptr.vmem [resolvable:$true] %s56
      %62 = dma.hbm_to_vmem [thread:$0]  %s3, 8192, %s57, [#allocation13], 256, 256, 16
    $region17: #{tpu_custom_call.1} parent=1 // pred_fallthru
      _
    // Predicated region
    $region18: #{tpu_custom_call.1} parent=1 // pred_check
      _
    $region19: #{tpu_custom_call.1} parent=1 // pred_check_branch
      %64 = sbr.rel (0) target = $region21
    $region20: #{tpu_custom_call.1} parent=1 // pred_region
      %s66 = ssub.s32 4096, 4096
      %67 = vsyncadd [#allocation13], %s66
      %s68 = sshll.u32 [#allocation14], 4
      %s69 = int_to_ptr.vmem [resolvable:$true] %s68
      %74 = dma.hbm_to_vmem [thread:$0]  %s4, 4096, %s69, [#allocation13], 128, 128, 8
    $region21: #{tpu_custom_call.1} parent=1 // pred_fallthru
      _
    // Predicated region
    $region22: #{tpu_custom_call.1} parent=1 // pred_check
      _
    $region23: #{tpu_custom_call.1} parent=1 // pred_check_branch
      %76 = sbr.rel (0) target = $region25
    $region24: #{tpu_custom_call.1} parent=1 // pred_region
      _
    $region25: #{tpu_custom_call.1} parent=1 // pred_fallthru
      _
    // Predicated region
    $region26: #{tpu_custom_call.1} parent=1 // pred_check
      _
    $region27: #{tpu_custom_call.1} parent=1 // pred_check_branch
      %78 = sbr.rel (0) target = $region29
    $region28: #{tpu_custom_call.1} parent=1 // pred_region
      %79 = dma.done [#allocation7], 256
    $region29: #{tpu_custom_call.1} parent=1 // pred_fallthru
      _
    // Predicated region
    $region30: #{tpu_custom_call.1} parent=1 // pred_check
      _
    $region31: #{tpu_custom_call.1} parent=1 // pred_check_branch
      %81 = sbr.rel (0) target = $region33
    $region32: #{tpu_custom_call.1} parent=1 // pred_region
      %82 = dma.done [#allocation10], 256
    $region33: #{tpu_custom_call.1} parent=1 // pred_fallthru
      _
    // Predicated region
    $region34: #{tpu_custom_call.1} parent=1 // pred_check
      _
    $region35: #{tpu_custom_call.1} parent=1 // pred_check_branch
      %84 = sbr.rel (0) target = $region37
    $region36: #{tpu_custom_call.1} parent=1 // pred_region
      %85 = dma.done [#allocation10], 4096
    $region37: #{tpu_custom_call.1} parent=1 // pred_fallthru
      _
    // Predicated region
    $region38: #{tpu_custom_call.1} parent=1 // pred_check
      _
    $region39: #{tpu_custom_call.1} parent=1 // pred_check_branch
      %87 = sbr.rel (0) target = $region41
    $region40: #{tpu_custom_call.1} parent=1 // pred_region
      %88 = dma.done [#allocation13], 8192
    $region41: #{tpu_custom_call.1} parent=1 // pred_fallthru
      _
    // Predicated region
    $region42: #{tpu_custom_call.1} parent=1 // pred_check
      _
    $region43: #{tpu_custom_call.1} parent=1 // pred_check_branch
      %90 = sbr.rel (0) target = $region45
    $region44: #{tpu_custom_call.1} parent=1 // pred_region
      %91 = dma.done [#allocation13], 4096
    $region45: #{tpu_custom_call.1} parent=1 // pred_fallthru
      _
    %v93 = vld [vmem:[%s5] sm:$0xff]
    %v94 = vld [vmem:[%s5 + $0x8] sm:$0xff]
    %p95 = scmp.eq.s32.totalorder 0, 0
    // Predicated region
    $region46: #{tpu_custom_call.1} parent=1 // pred_check
      %p96 = pneg %p95
    $region47: #{tpu_custom_call.1} parent=1 // pred_check_branch
      %98 = sbr.rel (%p96) target = $region49
    $region48: #{tpu_custom_call.1} parent=1 // pred_region
      %v99 = vld [vmem:[#allocation6] sm:$0xff]
      %v100 = vld [vmem:[#allocation6 + $0x8] sm:$0xff]
      %v101 = vld [vmem:[#allocation11] sm:$0xff]
      %v102 = vld [vmem:[#allocation11 + $0x8] sm:$0xff]
      %v103 = vld [vmem:[#allocation11 + $0x10] sm:$0xff]
      %v104 = vld [vmem:[#allocation11 + $0x18] sm:$0xff]
      %v105 = vld [vmem:[#allocation11 + $0x20] sm:$0xff]
      %v106 = vld [vmem:[#allocation11 + $0x28] sm:$0xff]
      %v107 = vld [vmem:[#allocation11 + $0x30] sm:$0xff]
      %v108 = vld [vmem:[#allocation11 + $0x38] sm:$0xff]
      %v109 = vld [vmem:[#allocation11 + $0x40] sm:$0xff]
      %v110 = vld [vmem:[#allocation11 + $0x48] sm:$0xff]
      %v111 = vld [vmem:[#allocation11 + $0x50] sm:$0xff]
      %v112 = vld [vmem:[#allocation11 + $0x58] sm:$0xff]
      %v113 = vld [vmem:[#allocation11 + $0x60] sm:$0xff]
      %v114 = vld [vmem:[#allocation11 + $0x68] sm:$0xff]
      %v115 = vld [vmem:[#allocation11 + $0x70] sm:$0xff]
      %v116 = vld [vmem:[#allocation11 + $0x78] sm:$0xff]
      %v117 = vld [vmem:[#allocation11 + $0x80] sm:$0xff]
      %v118 = vld [vmem:[#allocation11 + $0x88] sm:$0xff]
      %v119 = vld [vmem:[#allocation11 + $0x90] sm:$0xff]
      %v120 = vld [vmem:[#allocation11 + $0x98] sm:$0xff]
      %v121 = vld [vmem:[#allocation11 + $0xa0] sm:$0xff]
      %v122 = vld [vmem:[#allocation11 + $0xa8] sm:$0xff]
      %v123 = vld [vmem:[#allocation11 + $0xb0] sm:$0xff]
      %v124 = vld [vmem:[#allocation11 + $0xb8] sm:$0xff]
      %v125 = vld [vmem:[#allocation11 + $0xc0] sm:$0xff]
      %v126 = vld [vmem:[#allocation11 + $0xc8] sm:$0xff]
      %v127 = vld [vmem:[#allocation11 + $0xd0] sm:$0xff]
      %v128 = vld [vmem:[#allocation11 + $0xd8] sm:$0xff]
      %v129 = vld [vmem:[#allocation11 + $0xe0] sm:$0xff]
      %v130 = vld [vmem:[#allocation11 + $0xe8] sm:$0xff]
      %v131 = vld [vmem:[#allocation11 + $0xf0] sm:$0xff]
      %v132 = vld [vmem:[#allocation11 + $0xf8] sm:$0xff]
      %v133 = vlaneseq
      %v134 = vshrl.u32 %v133, 7
      %v135 = vsub.s32 0, %v134
      %v136 = vrot.slane %v93, %v135
      %v137 = vlaneseq
      %v138 = vshrl.u32 %v137, 7
      %v139 = vsub.s32 0, %v138
      %v140 = vrot.slane %v94, %v139
      %v143 = vunpack.c.l.b16 %v99
      %v144 = vunpack.c.h.b16 %v99
      %v145 = vunpack.c.l.b16 %v100
      %v146 = vunpack.c.h.b16 %v100
      %v147 = vpack.c.b16 %v145, %v143
      %v148 = vpack.c.b16 %v146, %v144
      %v183 = vunpack.c.l.b16 %v101
      %v184 = vunpack.c.h.b16 %v101
      %v185 = vunpack.c.l.b16 %v102
      %v186 = vunpack.c.h.b16 %v102
      %v187 = vunpack.c.l.b16 %v103
      %v188 = vunpack.c.h.b16 %v103
      %v189 = vunpack.c.l.b16 %v104
      %v190 = vunpack.c.h.b16 %v104
      %v191 = vunpack.c.l.b16 %v105
      %v192 = vunpack.c.h.b16 %v105
      %v193 = vunpack.c.l.b16 %v106
      %v194 = vunpack.c.h.b16 %v106
      %v195 = vunpack.c.l.b16 %v107
      %v196 = vunpack.c.h.b16 %v107
      %v197 = vunpack.c.l.b16 %v108
      %v198 = vunpack.c.h.b16 %v108
      %v199 = vunpack.c.l.b16 %v109
      %v200 = vunpack.c.h.b16 %v109
      %v201 = vunpack.c.l.b16 %v110
      %v202 = vunpack.c.h.b16 %v110
      %v203 = vunpack.c.l.b16 %v111
      %v204 = vunpack.c.h.b16 %v111
      %v205 = vunpack.c.l.b16 %v112
      %v206 = vunpack.c.h.b16 %v112
      %v207 = vunpack.c.l.b16 %v113
      %v208 = vunpack.c.h.b16 %v113
      %v209 = vunpack.c.l.b16 %v114
      %v210 = vunpack.c.h.b16 %v114
      %v211 = vunpack.c.l.b16 %v115
      %v212 = vunpack.c.h.b16 %v115
      %v213 = vunpack.c.l.b16 %v116
      %v214 = vunpack.c.h.b16 %v116
      %v215 = vunpack.c.l.b16 %v117
      %v216 = vunpack.c.h.b16 %v117
      %v217 = vunpack.c.l.b16 %v118
      %v218 = vunpack.c.h.b16 %v118
      %v219 = vunpack.c.l.b16 %v119
      %v220 = vunpack.c.h.b16 %v119
      %v221 = vunpack.c.l.b16 %v120
      %v222 = vunpack.c.h.b16 %v120
      %v223 = vunpack.c.l.b16 %v121
      %v224 = vunpack.c.h.b16 %v121
      %v225 = vunpack.c.l.b16 %v122
      %v226 = vunpack.c.h.b16 %v122
      %v227 = vunpack.c.l.b16 %v123
      %v228 = vunpack.c.h.b16 %v123
      %v229 = vunpack.c.l.b16 %v124
      %v230 = vunpack.c.h.b16 %v124
      %v231 = vunpack.c.l.b16 %v125
      %v232 = vunpack.c.h.b16 %v125
      %v233 = vunpack.c.l.b16 %v126
      %v234 = vunpack.c.h.b16 %v126
      %v235 = vunpack.c.l.b16 %v127
      %v236 = vunpack.c.h.b16 %v127
      %v237 = vunpack.c.l.b16 %v128
      %v238 = vunpack.c.h.b16 %v128
      %v239 = vunpack.c.l.b16 %v129
      %v240 = vunpack.c.h.b16 %v129
      %v241 = vunpack.c.l.b16 %v130
      %v242 = vunpack.c.h.b16 %v130
      %v243 = vunpack.c.l.b16 %v131
      %v244 = vunpack.c.h.b16 %v131
      %v245 = vunpack.c.l.b16 %v132
      %v246 = vunpack.c.h.b16 %v132
      %v247 = vpack.c.b16 %v185, %v183
      %v248 = vpack.c.b16 %v186, %v184
      %v249 = vpack.c.b16 %v189, %v187
      %v250 = vpack.c.b16 %v190, %v188
      %v251 = vpack.c.b16 %v193, %v191
      %v252 = vpack.c.b16 %v194, %v192
      %v253 = vpack.c.b16 %v197, %v195
      %v254 = vpack.c.b16 %v198, %v196
      %v255 = vpack.c.b16 %v201, %v199
      %v256 = vpack.c.b16 %v202, %v200
      %v257 = vpack.c.b16 %v205, %v203
      %v258 = vpack.c.b16 %v206, %v204
      %v259 = vpack.c.b16 %v209, %v207
      %v260 = vpack.c.b16 %v210, %v208
      %v261 = vpack.c.b16 %v213, %v211
      %v262 = vpack.c.b16 %v214, %v212
      %v263 = vpack.c.b16 %v217, %v215
      %v264 = vpack.c.b16 %v218, %v216
      %v265 = vpack.c.b16 %v221, %v219
      %v266 = vpack.c.b16 %v222, %v220
      %v267 = vpack.c.b16 %v225, %v223
      %v268 = vpack.c.b16 %v226, %v224
      %v269 = vpack.c.b16 %v229, %v227
      %v270 = vpack.c.b16 %v230, %v228
      %v271 = vpack.c.b16 %v233, %v231
      %v272 = vpack.c.b16 %v234, %v232
      %v273 = vpack.c.b16 %v237, %v235
      %v274 = vpack.c.b16 %v238, %v236
      %v275 = vpack.c.b16 %v241, %v239
      %v276 = vpack.c.b16 %v242, %v240
      %v277 = vpack.c.b16 %v245, %v243
      %v278 = vpack.c.b16 %v246, %v244
      %311 = vmatprep.subr.bf16.mxu0 %v248
      %312 = vmatpush1.bf16.msra.mxu0 %v247
      %313 = vmatprep.subr.bf16.mxu0 %v250
      %314 = vmatpush1.bf16.msra.mxu0 %v249
      %315 = vmatprep.subr.bf16.mxu0 %v252
      %316 = vmatpush1.bf16.msra.mxu0 %v251
      %317 = vmatprep.subr.bf16.mxu0 %v254
      %318 = vmatpush1.bf16.msra.mxu0 %v253
      %319 = vmatprep.subr.bf16.mxu0 %v256
      %320 = vmatpush1.bf16.msra.mxu0 %v255
      %321 = vmatprep.subr.bf16.mxu0 %v258
      %322 = vmatpush1.bf16.msra.mxu0 %v257
      %323 = vmatprep.subr.bf16.mxu0 %v260
      %324 = vmatpush1.bf16.msra.mxu0 %v259
      %325 = vmatprep.subr.bf16.mxu0 %v262
      %326 = vmatpush1.bf16.msra.mxu0 %v261
      %327 = vmatprep.subr.bf16.mxu0 %v264
      %328 = vmatpush1.bf16.msra.mxu0 %v263
      %329 = vmatprep.subr.bf16.mxu0 %v266
      %330 = vmatpush1.bf16.msra.mxu0 %v265
      %331 = vmatprep.subr.bf16.mxu0 %v268
      %332 = vmatpush1.bf16.msra.mxu0 %v267
      %333 = vmatprep.subr.bf16.mxu0 %v270
      %334 = vmatpush1.bf16.msra.mxu0 %v269
      %335 = vmatprep.subr.bf16.mxu0 %v272
      %336 = vmatpush1.bf16.msra.mxu0 %v271
      %337 = vmatprep.subr.bf16.mxu0 %v274
      %338 = vmatpush1.bf16.msra.mxu0 %v273
      %339 = vmatprep.subr.bf16.mxu0 %v276
      %340 = vmatpush1.bf16.msra.mxu0 %v275
      %341 = vmatprep.subr.bf16.mxu0 %v278
      %342 = vmatpush1.bf16.msra.mxu0 %v277
      %343 = vmatprep.mubr.bf16.mxu0 %v148
      %344 = vmatmul.mubr.bf16.gmra.mrb[0].mxu0 %v147
      %v345 = vpop.f32.mrb[0].mxu0
      %v346 = vadd.f32 %v136, %v345
      %v347 = vpop.f32.mrb[0].mxu0
      %v348 = vadd.f32 %v140, %v347
      %v349 = vpop.f32.mrb[0].mxu0
      %v350 = vadd.f32 %v136, %v349
      %v351 = vpop.f32.mrb[0].mxu0
      %v352 = vadd.f32 %v140, %v351
      %353 = vdwg.mxu0
      %v354 = vpack.c.bf16 %v346, %v346
      %v355 = vpack.c.bf16 %v348, %v348
      %v356 = vpack.c.bf16 %v350, %v350
      %v357 = vpack.c.bf16 %v352, %v352
      %v362 = vunpack.c.l.b16 %v354
      %v363 = vunpack.c.l.b16 %v355
      %v364 = vunpack.c.l.b16 %v356
      %v365 = vunpack.c.l.b16 %v357
      %v366 = vpack.c.b16 %v363, %v362
      %v367 = vpack.c.b16 %v365, %v364
      %370 = vst [vmem:[#allocation2] sm:$0xff] %v366
      %371 = vst [vmem:[#allocation2 + $0x8] sm:$0xff] %v367
      %vm372 = vcmask 7168
      %373 = vst.msk [vmem:[#allocation3] sm:$0xff] %vm372, -inf
      %374 = vst.msk [vmem:[#allocation3 + $0x8] sm:$0xff] %vm372, -inf
      %375 = vst.msk [vmem:[#allocation4] sm:$0xff] %vm372, 0.0
      %376 = vst.msk [vmem:[#allocation4 + $0x8] sm:$0xff] %vm372, 0.0
      %377 = vst [vmem:[#allocation5] sm:$0xff] 0.0
      %378 = vst [vmem:[#allocation5 + $0x8] sm:$0xff] 0.0
      %379 = vst [vmem:[#allocation5 + $0x10] sm:$0xff] 0.0
      %380 = vst [vmem:[#allocation5 + $0x18] sm:$0xff] 0.0
    $region49: #{tpu_custom_call.1} parent=1 // pred_fallthru
      _
    %v381 = vld [vmem:[#allocation9] sm:$0xff]
    %v382 = vld [vmem:[#allocation9 + $0x8] sm:$0xff]
    %v383 = vld [vmem:[#allocation12] sm:$0xff]
    %v384 = vld [vmem:[#allocation12 + $0x8] sm:$0xff]
    %v385 = vld [vmem:[#allocation12 + $0x10] sm:$0xff]
    %v386 = vld [vmem:[#allocation12 + $0x18] sm:$0xff]
    %v387 = vld [vmem:[#allocation12 + $0x20] sm:$0xff]
    %v388 = vld [vmem:[#allocation12 + $0x28] sm:$0xff]
    %v389 = vld [vmem:[#allocation12 + $0x30] sm:$0xff]
    %v390 = vld [vmem:[#allocation12 + $0x38] sm:$0xff]
    %v391 = vld [vmem:[#allocation12 + $0x40] sm:$0xff]
    %v392 = vld [vmem:[#allocation12 + $0x48] sm:$0xff]
    %v393 = vld [vmem:[#allocation12 + $0x50] sm:$0xff]
    %v394 = vld [vmem:[#allocation12 + $0x58] sm:$0xff]
    %v395 = vld [vmem:[#allocation12 + $0x60] sm:$0xff]
    %v396 = vld [vmem:[#allocation12 + $0x68] sm:$0xff]
    %v397 = vld [vmem:[#allocation12 + $0x70] sm:$0xff]
    %v398 = vld [vmem:[#allocation12 + $0x78] sm:$0xff]
    %v399 = vld [vmem:[#allocation12 + $0x80] sm:$0xff]
    %v400 = vld [vmem:[#allocation12 + $0x88] sm:$0xff]
    %v401 = vld [vmem:[#allocation12 + $0x90] sm:$0xff]
    %v402 = vld [vmem:[#allocation12 + $0x98] sm:$0xff]
    %v403 = vld [vmem:[#allocation12 + $0xa0] sm:$0xff]
    %v404 = vld [vmem:[#allocation12 + $0xa8] sm:$0xff]
    %v405 = vld [vmem:[#allocation12 + $0xb0] sm:$0xff]
    %v406 = vld [vmem:[#allocation12 + $0xb8] sm:$0xff]
    %v407 = vld [vmem:[#allocation12 + $0xc0] sm:$0xff]
    %v408 = vld [vmem:[#allocation12 + $0xc8] sm:$0xff]
    %v409 = vld [vmem:[#allocation12 + $0xd0] sm:$0xff]
    %v410 = vld [vmem:[#allocation12 + $0xd8] sm:$0xff]
    %v411 = vld [vmem:[#allocation12 + $0xe0] sm:$0xff]
    %v412 = vld [vmem:[#allocation12 + $0xe8] sm:$0xff]
    %v413 = vld [vmem:[#allocation12 + $0xf0] sm:$0xff]
    %v414 = vld [vmem:[#allocation12 + $0xf8] sm:$0xff]
    %v415 = vld [vmem:[#allocation12 + $0x100] sm:$0xff]
    %v416 = vld [vmem:[#allocation12 + $0x108] sm:$0xff]
    %v417 = vld [vmem:[#allocation12 + $0x110] sm:$0xff]
    %v418 = vld [vmem:[#allocation12 + $0x118] sm:$0xff]
    %v419 = vld [vmem:[#allocation12 + $0x120] sm:$0xff]
    %v420 = vld [vmem:[#allocation12 + $0x128] sm:$0xff]
    %v421 = vld [vmem:[#allocation12 + $0x130] sm:$0xff]
    %v422 = vld [vmem:[#allocation12 + $0x138] sm:$0xff]
    %v423 = vld [vmem:[#allocation12 + $0x140] sm:$0xff]
    %v424 = vld [vmem:[#allocation12 + $0x148] sm:$0xff]
    %v425 = vld [vmem:[#allocation12 + $0x150] sm:$0xff]
    %v426 = vld [vmem:[#allocation12 + $0x158] sm:$0xff]
    %v427 = vld [vmem:[#allocation12 + $0x160] sm:$0xff]
    %v428 = vld [vmem:[#allocation12 + $0x168] sm:$0xff]
    %v429 = vld [vmem:[#allocation12 + $0x170] sm:$0xff]
    %v430 = vld [vmem:[#allocation12 + $0x178] sm:$0xff]
    %v431 = vld [vmem:[#allocation12 + $0x180] sm:$0xff]
    %v432 = vld [vmem:[#allocation12 + $0x188] sm:$0xff]
    %v433 = vld [vmem:[#allocation12 + $0x190] sm:$0xff]
    %v434 = vld [vmem:[#allocation12 + $0x198] sm:$0xff]
    %v435 = vld [vmem:[#allocation12 + $0x1a0] sm:$0xff]
    %v436 = vld [vmem:[#allocation12 + $0x1a8] sm:$0xff]
    %v437 = vld [vmem:[#allocation12 + $0x1b0] sm:$0xff]
    %v438 = vld [vmem:[#allocation12 + $0x1b8] sm:$0xff]
    %v439 = vld [vmem:[#allocation12 + $0x1c0] sm:$0xff]
    %v440 = vld [vmem:[#allocation12 + $0x1c8] sm:$0xff]
    %v441 = vld [vmem:[#allocation12 + $0x1d0] sm:$0xff]
    %v442 = vld [vmem:[#allocation12 + $0x1d8] sm:$0xff]
    %v443 = vld [vmem:[#allocation12 + $0x1e0] sm:$0xff]
    %v444 = vld [vmem:[#allocation12 + $0x1e8] sm:$0xff]
    %v445 = vld [vmem:[#allocation12 + $0x1f0] sm:$0xff]
    %v446 = vld [vmem:[#allocation12 + $0x1f8] sm:$0xff]
    %v449 = vunpack.c.l.b16 %v381
    %v450 = vunpack.c.h.b16 %v381
    %v451 = vunpack.c.l.b16 %v382
    %v452 = vunpack.c.h.b16 %v382
    %v453 = vpack.c.b16 %v451, %v449
    %v454 = vpack.c.b16 %v452, %v450
    %v521 = vunpack.c.l.b16 %v383
    %v522 = vunpack.c.h.b16 %v383
    %v523 = vunpack.c.l.b16 %v384
    %v524 = vunpack.c.h.b16 %v384
    %v525 = vunpack.c.l.b16 %v385
    %v526 = vunpack.c.h.b16 %v385
    %v527 = vunpack.c.l.b16 %v386
    %v528 = vunpack.c.h.b16 %v386
    %v529 = vunpack.c.l.b16 %v387
    %v530 = vunpack.c.h.b16 %v387
    %v531 = vunpack.c.l.b16 %v388
    %v532 = vunpack.c.h.b16 %v388
    %v533 = vunpack.c.l.b16 %v389
    %v534 = vunpack.c.h.b16 %v389
    %v535 = vunpack.c.l.b16 %v390
    %v536 = vunpack.c.h.b16 %v390
    %v537 = vunpack.c.l.b16 %v391
    %v538 = vunpack.c.h.b16 %v391
    %v539 = vunpack.c.l.b16 %v392
    %v540 = vunpack.c.h.b16 %v392
    %v541 = vunpack.c.l.b16 %v393
    %v542 = vunpack.c.h.b16 %v393
    %v543 = vunpack.c.l.b16 %v394
    %v544 = vunpack.c.h.b16 %v394
    %v545 = vunpack.c.l.b16 %v395
    %v546 = vunpack.c.h.b16 %v395
    %v547 = vunpack.c.l.b16 %v396
    %v548 = vunpack.c.h.b16 %v396
    %v549 = vunpack.c.l.b16 %v397
    %v550 = vunpack.c.h.b16 %v397
    %v551 = vunpack.c.l.b16 %v398
    %v552 = vunpack.c.h.b16 %v398
    %v553 = vunpack.c.l.b16 %v399
    %v554 = vunpack.c.h.b16 %v399
    %v555 = vunpack.c.l.b16 %v400
    %v556 = vunpack.c.h.b16 %v400
    %v557 = vunpack.c.l.b16 %v401
    %v558 = vunpack.c.h.b16 %v401
    %v559 = vunpack.c.l.b16 %v402
    %v560 = vunpack.c.h.b16 %v402
    %v561 = vunpack.c.l.b16 %v403
    %v562 = vunpack.c.h.b16 %v403
    %v563 = vunpack.c.l.b16 %v404
    %v564 = vunpack.c.h.b16 %v404
    %v565 = vunpack.c.l.b16 %v405
    %v566 = vunpack.c.h.b16 %v405
    %v567 = vunpack.c.l.b16 %v406
    %v568 = vunpack.c.h.b16 %v406
    %v569 = vunpack.c.l.b16 %v407
    %v570 = vunpack.c.h.b16 %v407
    %v571 = vunpack.c.l.b16 %v408
    %v572 = vunpack.c.h.b16 %v408
    %v573 = vunpack.c.l.b16 %v409
    %v574 = vunpack.c.h.b16 %v409
    %v575 = vunpack.c.l.b16 %v410
    %v576 = vunpack.c.h.b16 %v410
    %v577 = vunpack.c.l.b16 %v411
    %v578 = vunpack.c.h.b16 %v411
    %v579 = vunpack.c.l.b16 %v412
    %v580 = vunpack.c.h.b16 %v412
    %v581 = vunpack.c.l.b16 %v413
    %v582 = vunpack.c.h.b16 %v413
    %v583 = vunpack.c.l.b16 %v414
    %v584 = vunpack.c.h.b16 %v414
    %v585 = vunpack.c.l.b16 %v415
    %v586 = vunpack.c.h.b16 %v415
    %v587 = vunpack.c.l.b16 %v416
    %v588 = vunpack.c.h.b16 %v416
    %v589 = vunpack.c.l.b16 %v417
    %v590 = vunpack.c.h.b16 %v417
    %v591 = vunpack.c.l.b16 %v418
    %v592 = vunpack.c.h.b16 %v418
    %v593 = vunpack.c.l.b16 %v419
    %v594 = vunpack.c.h.b16 %v419
    %v595 = vunpack.c.l.b16 %v420
    %v596 = vunpack.c.h.b16 %v420
    %v597 = vunpack.c.l.b16 %v421
    %v598 = vunpack.c.h.b16 %v421
    %v599 = vunpack.c.l.b16 %v422
    %v600 = vunpack.c.h.b16 %v422
    %v601 = vunpack.c.l.b16 %v423
    %v602 = vunpack.c.h.b16 %v423
    %v603 = vunpack.c.l.b16 %v424
    %v604 = vunpack.c.h.b16 %v424
    %v605 = vunpack.c.l.b16 %v425
    %v606 = vunpack.c.h.b16 %v425
    %v607 = vunpack.c.l.b16 %v426
    %v608 = vunpack.c.h.b16 %v426
    %v609 = vunpack.c.l.b16 %v427
    %v610 = vunpack.c.h.b16 %v427
    %v611 = vunpack.c.l.b16 %v428
    %v612 = vunpack.c.h.b16 %v428
    %v613 = vunpack.c.l.b16 %v429
    %v614 = vunpack.c.h.b16 %v429
    %v615 = vunpack.c.l.b16 %v430
    %v616 = vunpack.c.h.b16 %v430
    %v617 = vunpack.c.l.b16 %v431
    %v618 = vunpack.c.h.b16 %v431
    %v619 = vunpack.c.l.b16 %v432
    %v620 = vunpack.c.h.b16 %v432
    %v621 = vunpack.c.l.b16 %v433
    %v622 = vunpack.c.h.b16 %v433
    %v623 = vunpack.c.l.b16 %v434
    %v624 = vunpack.c.h.b16 %v434
    %v625 = vunpack.c.l.b16 %v435
    %v626 = vunpack.c.h.b16 %v435
    %v627 = vunpack.c.l.b16 %v436
    %v628 = vunpack.c.h.b16 %v436
    %v629 = vunpack.c.l.b16 %v437
    %v630 = vunpack.c.h.b16 %v437
    %v631 = vunpack.c.l.b16 %v438
    %v632 = vunpack.c.h.b16 %v438
    %v633 = vunpack.c.l.b16 %v439
    %v634 = vunpack.c.h.b16 %v439
    %v635 = vunpack.c.l.b16 %v440
    %v636 = vunpack.c.h.b16 %v440
    %v637 = vunpack.c.l.b16 %v441
    %v638 = vunpack.c.h.b16 %v441
    %v639 = vunpack.c.l.b16 %v442
    %v640 = vunpack.c.h.b16 %v442
    %v641 = vunpack.c.l.b16 %v443
    %v642 = vunpack.c.h.b16 %v443
    %v643 = vunpack.c.l.b16 %v444
    %v644 = vunpack.c.h.b16 %v444
    %v645 = vunpack.c.l.b16 %v445
    %v646 = vunpack.c.h.b16 %v445
    %v647 = vunpack.c.l.b16 %v446
    %v648 = vunpack.c.h.b16 %v446
    %v649 = vpack.c.b16 %v525, %v521
    %v650 = vpack.c.b16 %v526, %v522
    %v651 = vpack.c.b16 %v527, %v523
    %v652 = vpack.c.b16 %v528, %v524
    %v653 = vpack.c.b16 %v533, %v529
    %v654 = vpack.c.b16 %v534, %v530
    %v655 = vpack.c.b16 %v535, %v531
    %v656 = vpack.c.b16 %v536, %v532
    %v657 = vpack.c.b16 %v541, %v537
    %v658 = vpack.c.b16 %v542, %v538
    %v659 = vpack.c.b16 %v543, %v539
    %v660 = vpack.c.b16 %v544, %v540
    %v661 = vpack.c.b16 %v549, %v545
    %v662 = vpack.c.b16 %v550, %v546
    %v663 = vpack.c.b16 %v551, %v547
    %v664 = vpack.c.b16 %v552, %v548
    %v665 = vpack.c.b16 %v557, %v553
    %v666 = vpack.c.b16 %v558, %v554
    %v667 = vpack.c.b16 %v559, %v555
    %v668 = vpack.c.b16 %v560, %v556
    %v669 = vpack.c.b16 %v565, %v561
    %v670 = vpack.c.b16 %v566, %v562
    %v671 = vpack.c.b16 %v567, %v563
    %v672 = vpack.c.b16 %v568, %v564
    %v673 = vpack.c.b16 %v573, %v569
    %v674 = vpack.c.b16 %v574, %v570
    %v675 = vpack.c.b16 %v575, %v571
    %v676 = vpack.c.b16 %v576, %v572
    %v677 = vpack.c.b16 %v581, %v577
    %v678 = vpack.c.b16 %v582, %v578
    %v679 = vpack.c.b16 %v583, %v579
    %v680 = vpack.c.b16 %v584, %v580
    %v681 = vpack.c.b16 %v589, %v585
    %v682 = vpack.c.b16 %v590, %v586
    %v683 = vpack.c.b16 %v591, %v587
    %v684 = vpack.c.b16 %v592, %v588
    %v685 = vpack.c.b16 %v597, %v593
    %v686 = vpack.c.b16 %v598, %v594
    %v687 = vpack.c.b16 %v599, %v595
    %v688 = vpack.c.b16 %v600, %v596
    %v689 = vpack.c.b16 %v605, %v601
    %v690 = vpack.c.b16 %v606, %v602
    %v691 = vpack.c.b16 %v607, %v603
    %v692 = vpack.c.b16 %v608, %v604
    %v693 = vpack.c.b16 %v613, %v609
    %v694 = vpack.c.b16 %v614, %v610
    %v695 = vpack.c.b16 %v615, %v611
    %v696 = vpack.c.b16 %v616, %v612
    %v697 = vpack.c.b16 %v621, %v617
    %v698 = vpack.c.b16 %v622, %v618
    %v699 = vpack.c.b16 %v623, %v619
    %v700 = vpack.c.b16 %v624, %v620
    %v701 = vpack.c.b16 %v629, %v625
    %v702 = vpack.c.b16 %v630, %v626
    %v703 = vpack.c.b16 %v631, %v627
    %v704 = vpack.c.b16 %v632, %v628
    %v705 = vpack.c.b16 %v637, %v633
    %v706 = vpack.c.b16 %v638, %v634
    %v707 = vpack.c.b16 %v639, %v635
    %v708 = vpack.c.b16 %v640, %v636
    %v709 = vpack.c.b16 %v645, %v641
    %v710 = vpack.c.b16 %v646, %v642
    %v711 = vpack.c.b16 %v647, %v643
    %v712 = vpack.c.b16 %v648, %v644
    %777 = vmatprep.subr.bf16.mxu0 %v650
    %778 = vmatpush1.bf16.msra.mxu0 %v649
    %779 = vmatprep.subr.bf16.mxu0 %v654
    %780 = vmatpush1.bf16.msra.mxu0 %v653
    %781 = vmatprep.subr.bf16.mxu0 %v658
    %782 = vmatpush1.bf16.msra.mxu0 %v657
    %783 = vmatprep.subr.bf16.mxu0 %v662
    %784 = vmatpush1.bf16.msra.mxu0 %v661
    %785 = vmatprep.subr.bf16.mxu0 %v666
    %786 = vmatpush1.bf16.msra.mxu0 %v665
    %787 = vmatprep.subr.bf16.mxu0 %v670
    %788 = vmatpush1.bf16.msra.mxu0 %v669
    %789 = vmatprep.subr.bf16.mxu0 %v674
    %790 = vmatpush1.bf16.msra.mxu0 %v673
    %791 = vmatprep.subr.bf16.mxu0 %v678
    %792 = vmatpush1.bf16.msra.mxu0 %v677
    %793 = vmatprep.subr.bf16.mxu0 %v682
    %794 = vmatpush1.bf16.msra.mxu0 %v681
    %795 = vmatprep.subr.bf16.mxu0 %v686
    %796 = vmatpush1.bf16.msra.mxu0 %v685
    %797 = vmatprep.subr.bf16.mxu0 %v690
    %798 = vmatpush1.bf16.msra.mxu0 %v689
    %799 = vmatprep.subr.bf16.mxu0 %v694
    %800 = vmatpush1.bf16.msra.mxu0 %v693
    %801 = vmatprep.subr.bf16.mxu0 %v698
    %802 = vmatpush1.bf16.msra.mxu0 %v697
    %803 = vmatprep.subr.bf16.mxu0 %v702
    %804 = vmatpush1.bf16.msra.mxu0 %v701
    %805 = vmatprep.subr.bf16.mxu0 %v706
    %806 = vmatpush1.bf16.msra.mxu0 %v705
    %807 = vmatprep.subr.bf16.mxu0 %v710
    %808 = vmatpush1.bf16.msra.mxu0 %v709
    %809 = vmatprep.mubr.bf16.mxu0 %v454
    %810 = vmatmul.mubr.bf16.gmra.mrb[0].mxu0 %v453
    %v811 = vpop.f32.mrb[0].mxu0
    %v812 = vadd.f32 0.0, %v811
    %v813 = vpop.f32.mrb[0].mxu0
    %v814 = vadd.f32 0.0, %v813
    %v815 = vpop.f32.mrb[0].mxu0
    %v816 = vadd.f32 0.0, %v815
    %v817 = vpop.f32.mrb[0].mxu0
    %v818 = vadd.f32 0.0, %v817
    %819 = vdwg.mxu0
    %820 = vmatprep.subr.bf16.mxu0 %v652
    %821 = vmatpush1.bf16.msra.mxu0 %v651
    %822 = vmatprep.subr.bf16.mxu0 %v656
    %823 = vmatpush1.bf16.msra.mxu0 %v655
    %824 = vmatprep.subr.bf16.mxu0 %v660
    %825 = vmatpush1.bf16.msra.mxu0 %v659
    %826 = vmatprep.subr.bf16.mxu0 %v664
    %827 = vmatpush1.bf16.msra.mxu0 %v663
    %828 = vmatprep.subr.bf16.mxu0 %v668
    %829 = vmatpush1.bf16.msra.mxu0 %v667
    %830 = vmatprep.subr.bf16.mxu0 %v672
    %831 = vmatpush1.bf16.msra.mxu0 %v671
    %832 = vmatprep.subr.bf16.mxu0 %v676
    %833 = vmatpush1.bf16.msra.mxu0 %v675
    %834 = vmatprep.subr.bf16.mxu0 %v680
    %835 = vmatpush1.bf16.msra.mxu0 %v679
    %836 = vmatprep.subr.bf16.mxu0 %v684
    %837 = vmatpush1.bf16.msra.mxu0 %v683
    %838 = vmatprep.subr.bf16.mxu0 %v688
    %839 = vmatpush1.bf16.msra.mxu0 %v687
    %840 = vmatprep.subr.bf16.mxu0 %v692
    %841 = vmatpush1.bf16.msra.mxu0 %v691
    %842 = vmatprep.subr.bf16.mxu0 %v696
    %843 = vmatpush1.bf16.msra.mxu0 %v695
    %844 = vmatprep.subr.bf16.mxu0 %v700
    %845 = vmatpush1.bf16.msra.mxu0 %v699
    %846 = vmatprep.subr.bf16.mxu0 %v704
    %847 = vmatpush1.bf16.msra.mxu0 %v703
    %848 = vmatprep.subr.bf16.mxu0 %v708
    %849 = vmatpush1.bf16.msra.mxu0 %v707
    %850 = vmatprep.subr.bf16.mxu0 %v712
    %851 = vmatpush1.bf16.msra.mxu0 %v711
    %852 = vmatprep.mubr.bf16.mxu0 %v454
    %853 = vmatmul.mubr.bf16.gmra.mrb[0].mxu0 %v453
    %v854 = vpop.f32.mrb[0].mxu0
    %v855 = vadd.f32 0.0, %v854
    %v856 = vpop.f32.mrb[0].mxu0
    %v857 = vadd.f32 0.0, %v856
    %v858 = vpop.f32.mrb[0].mxu0
    %v859 = vadd.f32 0.0, %v858
    %v860 = vpop.f32.mrb[0].mxu0
    %v861 = vadd.f32 0.0, %v860
    %862 = vdwg.mxu0
    %v863 = vlaneseq
    %v864 = vshrl.u32 %v863, 7
    %v865 = vsub.s32 1, %v864
    %v866 = vrot.slane %v93, %v865
    %v867 = vlaneseq
    %v868 = vshrl.u32 %v867, 7
    %v869 = vsub.s32 1, %v868
    %v870 = vrot.slane %v94, %v869
    %v871 = vadd.f32 %v812, %v866
    %v872 = vadd.f32 %v814, %v870
    %v873 = vadd.f32 %v816, %v866
    %v874 = vadd.f32 %v818, %v870
    %v875 = vpack.c.bf16 %v871, %v871
    %v876 = vpack.c.bf16 %v872, %v872
    %v877 = vpack.c.bf16 %v873, %v873
    %v878 = vpack.c.bf16 %v874, %v874
    %v879 = vlaneseq
    %v880 = vshrl.u32 %v879, 7
    %v881 = vsub.s32 2, %v880
    %v882 = vrot.slane %v93, %v881
    %v883 = vlaneseq
    %v884 = vshrl.u32 %v883, 7
    %v885 = vsub.s32 2, %v884
    %v886 = vrot.slane %v94, %v885
    %v887 = vadd.f32 %v855, %v882
    %v888 = vadd.f32 %v857, %v886
    %v889 = vadd.f32 %v859, %v882
    %v890 = vadd.f32 %v861, %v886
    %v891 = vpack.c.bf16 %v887, %v887
    %v892 = vpack.c.bf16 %v888, %v888
    %v893 = vpack.c.bf16 %v889, %v889
    %v894 = vpack.c.bf16 %v890, %v890
    %v895 = vld [vmem:[#allocation2] sm:$0xff]
    %v896 = vld [vmem:[#allocation2 + $0x8] sm:$0xff]
    %v898 = vunpack.c.l.b16 %v895
    %v899 = vunpack.c.h.b16 %v895
    %v900 = vpack.c.b16 %v898, %v898
    %v901 = vpack.c.b16 %v899, %v899
    %904 = vmatprep.subr.bf16.mxu0 %v876
    %905 = vmatpush1.bf16.xpose.msra.mxu0 %v875
    %906 = vmatprep.subr.bf16.mxu0 0
    %907 = vmatpush1.bf16.xpose.msra.mxu0 0
    %908 = vmatprep.subr.bf16.mxu0 0
    %909 = vmatpush1.bf16.xpose.msra.mxu0 0
    %910 = vmatprep.subr.bf16.mxu0 0
    %911 = vmatpush1.bf16.xpose.msra.mxu0 0
    %912 = vmatprep.subr.bf16.mxu0 0
    %913 = vmatpush1.bf16.xpose.msra.mxu0 0
    %914 = vmatprep.subr.bf16.mxu0 0
    %915 = vmatpush1.bf16.xpose.msra.mxu0 0
    %916 = vmatprep.subr.bf16.mxu0 0
    %917 = vmatpush1.bf16.xpose.msra.mxu0 0
    %918 = vmatprep.subr.bf16.mxu0 0
    %919 = vmatpush1.bf16.xpose.msra.mxu0 0
    %920 = vmatprep.subr.bf16.mxu0 0
    %921 = vmatpush1.bf16.xpose.msra.mxu0 0
    %922 = vmatprep.subr.bf16.mxu0 0
    %923 = vmatpush1.bf16.xpose.msra.mxu0 0
    %924 = vmatprep.subr.bf16.mxu0 0
    %925 = vmatpush1.bf16.xpose.msra.mxu0 0
    %926 = vmatprep.subr.bf16.mxu0 0
    %927 = vmatpush1.bf16.xpose.msra.mxu0 0
    %928 = vmatprep.subr.bf16.mxu0 0
    %929 = vmatpush1.bf16.xpose.msra.mxu0 0
    %930 = vmatprep.subr.bf16.mxu0 0
    %931 = vmatpush1.bf16.xpose.msra.mxu0 0
    %932 = vmatprep.subr.bf16.mxu0 0
    %933 = vmatpush1.bf16.xpose.msra.mxu0 0
    %934 = vmatprep.subr.bf16.mxu0 0
    %935 = vmatpush1.bf16.xpose.msra.mxu0 0
    %936 = vmatprep.mubr.bf16.mxu0 %v901
    %937 = vmatmul.mubr.bf16.gmra.mrb[0].mxu0 %v900
    %v938 = vpop.f32.mrb[0].mxu0
    %v939 = vadd.f32 0.0, %v938
    %v940 = vpop.f32.mrb[0].mxu0
    %v941 = vpop.f32.mrb[0].mxu0
    %v942 = vpop.f32.mrb[0].mxu0
    %943 = vdwg.mxu0
    %v945 = vunpack.c.l.b16 %v896
    %v946 = vunpack.c.h.b16 %v896
    %v947 = vpack.c.b16 %v945, %v945
    %v948 = vpack.c.b16 %v946, %v946
    %951 = vmatprep.subr.bf16.mxu0 %v878
    %952 = vmatpush1.bf16.xpose.msra.mxu0 %v877
    %953 = vmatprep.subr.bf16.mxu0 0
    %954 = vmatpush1.bf16.xpose.msra.mxu0 0
    %955 = vmatprep.subr.bf16.mxu0 0
    %956 = vmatpush1.bf16.xpose.msra.mxu0 0
    %957 = vmatprep.subr.bf16.mxu0 0
    %958 = vmatpush1.bf16.xpose.msra.mxu0 0
    %959 = vmatprep.subr.bf16.mxu0 0
    %960 = vmatpush1.bf16.xpose.msra.mxu0 0
    %961 = vmatprep.subr.bf16.mxu0 0
    %962 = vmatpush1.bf16.xpose.msra.mxu0 0
    %963 = vmatprep.subr.bf16.mxu0 0
    %964 = vmatpush1.bf16.xpose.msra.mxu0 0
    %965 = vmatprep.subr.bf16.mxu0 0
    %966 = vmatpush1.bf16.xpose.msra.mxu0 0
    %967 = vmatprep.subr.bf16.mxu0 0
    %968 = vmatpush1.bf16.xpose.msra.mxu0 0
    %969 = vmatprep.subr.bf16.mxu0 0
    %970 = vmatpush1.bf16.xpose.msra.mxu0 0
    %971 = vmatprep.subr.bf16.mxu0 0
    %972 = vmatpush1.bf16.xpose.msra.mxu0 0
    %973 = vmatprep.subr.bf16.mxu0 0
    %974 = vmatpush1.bf16.xpose.msra.mxu0 0
    %975 = vmatprep.subr.bf16.mxu0 0
    %976 = vmatpush1.bf16.xpose.msra.mxu0 0
    %977 = vmatprep.subr.bf16.mxu0 0
    %978 = vmatpush1.bf16.xpose.msra.mxu0 0
    %979 = vmatprep.subr.bf16.mxu0 0
    %980 = vmatpush1.bf16.xpose.msra.mxu0 0
    %981 = vmatprep.subr.bf16.mxu0 0
    %982 = vmatpush1.bf16.xpose.msra.mxu0 0
    %983 = vmatprep.mubr.bf16.mxu0 %v948
    %984 = vmatmul.mubr.bf16.gmra.mrb[0].mxu0 %v947
    %v985 = vpop.f32.mrb[0].mxu0
    %v986 = vadd.f32 0.0, %v985
    %v987 = vpop.f32.mrb[0].mxu0
    %v988 = vpop.f32.mrb[0].mxu0
    %v989 = vpop.f32.mrb[0].mxu0
    %990 = vdwg.mxu0
    %v991 = vlaneseq
    %v992 = vand.u32 %v991, 127
    %s993 = smul.u32 0, 8
    %v994 = vstv %s993
    %v995 = vadd.s32 %v992, %v994
    %vm996 = vcmp.lt.s32.totalorder %v995, 8
    %v997 = vsel %vm996, %v939, -inf
    %v998 = vsel %vm996, %v986, -inf
    %v999 = vld [vmem:[#allocation3] sm:$0xff]
    %v1000 = vld [vmem:[#allocation3 + $0x8] sm:$0xff]
    %vm1001 = vcmask 64512
    %v1002 = vsel %vm1001, %v997, -inf
    %1003 = vmax.xlane.f32.xlu0 %v1002
    %v1004 = vpop.xlane.xlu0 %1003
    %v1005 = vsel %vm1001, %v998, -inf
    %1006 = vmax.xlane.f32.xlu0 %v1005
    %v1007 = vpop.xlane.xlu0 %1006
    %v1008 = vmax.f32 %v999, %v1004
    %v1009 = vmax.f32 %v1000, %v1007
    %v1010 = vsub.f32 %v999, %v1008
    %v1011 = vsub.f32 %v1000, %v1009
    %v1012 = vmul.f32 %v1010, 1.442695
    %v1013 = vpow.pop %v1012
    %v1014 = vmul.f32 %v1011, 1.442695
    %v1015 = vpow.pop %v1014
    %1017 = vset.pattern.permute.xlu0 0
    %1018 = vperm.xlu0 %1017, %v1008
    %v1019 = vpop.permute.xlu0 %1018
    %1022 = vset.pattern.permute.xlu0 0
    %1023 = vperm.xlu0 %1022, %v1009
    %v1024 = vpop.permute.xlu0 %1023
    %v1026 = vsub.f32 %v997, %v1019
    %v1027 = vsub.f32 %v998, %v1024
    %v1028 = vmul.f32 %v1026, 1.442695
    %v1029 = vpow.pop %v1028
    %v1030 = vmul.f32 %v1027, 1.442695
    %v1031 = vpow.pop %v1030
    %v1032 = vld [vmem:[#allocation4] sm:$0xff]
    %v1033 = vld [vmem:[#allocation4 + $0x8] sm:$0xff]
    %v1034 = vmul.f32 %v1013, %v1032
    %v1035 = vmul.f32 %v1015, %v1033
    %v1036 = vsel %vm1001, %v1029, 0.0
    %1037 = vadd.xlane.f32.xlu0 %v1036
    %v1038 = vpop.xlane.xlu0 %1037
    %v1039 = vsel %vm1001, %v1031, 0.0
    %1040 = vadd.xlane.f32.xlu0 %v1039
    %v1041 = vpop.xlane.xlu0 %1040
    %v1042 = vadd.f32 %v1034, %v1038
    %v1043 = vadd.f32 %v1035, %v1041
    %vm1044 = vcmask 7168
    %1045 = vst.msk [vmem:[#allocation4] sm:$0xff] %vm1044, %v1042
    %1046 = vst.msk [vmem:[#allocation4 + $0x8] sm:$0xff] %vm1044, %v1043
    %v1047 = vld [vmem:[#allocation5] sm:$0xff]
    %v1048 = vld [vmem:[#allocation5 + $0x8] sm:$0xff]
    %v1049 = vld [vmem:[#allocation5 + $0x10] sm:$0xff]
    %v1050 = vld [vmem:[#allocation5 + $0x18] sm:$0xff]
    %1052 = vset.pattern.permute.xlu0 0
    %1053 = vperm.xlu0 %1052, %v1013
    %v1054 = vpop.permute.xlu0 %1053
    %1057 = vset.pattern.permute.xlu0 0
    %1058 = vperm.xlu0 %1057, %v1015
    %v1059 = vpop.permute.xlu0 %1058
    %v1061 = vmul.f32 %v1054, %v1047
    %v1062 = vmul.f32 %v1054, %v1048
    %v1063 = vmul.f32 %v1059, %v1049
    %v1064 = vmul.f32 %v1059, %v1050
    %v1065 = vpack.c.bf16 %v1029, %v1029
    %v1066 = vpack.c.bf16 %v1031, %v1031
    %v1068 = vsel %vm1001, %v1065, 0
    %vm1070 = vcmask 1043456
    %v1072 = vsel %vm1070, %v891, 0
    %v1075 = vsel %vm1070, %v892, 0
    %1077 = vmatprep.subr.bf16.mxu0 %v1075
    %1078 = vmatpush1.bf16.msra.mxu0 %v1072
    %1079 = vmatprep.subr.bf16.mxu0 0
    %1080 = vmatpush1.bf16.msra.mxu0 0
    %1081 = vmatprep.subr.bf16.mxu0 0
    %1082 = vmatpush1.bf16.msra.mxu0 0
    %1083 = vmatprep.subr.bf16.mxu0 0
    %1084 = vmatpush1.bf16.msra.mxu0 0
    %1085 = vmatprep.subr.bf16.mxu0 0
    %1086 = vmatpush1.bf16.msra.mxu0 0
    %1087 = vmatprep.subr.bf16.mxu0 0
    %1088 = vmatpush1.bf16.msra.mxu0 0
    %1089 = vmatprep.subr.bf16.mxu0 0
    %1090 = vmatpush1.bf16.msra.mxu0 0
    %1091 = vmatprep.subr.bf16.mxu0 0
    %1092 = vmatpush1.bf16.msra.mxu0 0
    %1093 = vmatprep.subr.bf16.mxu0 0
    %1094 = vmatpush1.bf16.msra.mxu0 0
    %1095 = vmatprep.subr.bf16.mxu0 0
    %1096 = vmatpush1.bf16.msra.mxu0 0
    %1097 = vmatprep.subr.bf16.mxu0 0
    %1098 = vmatpush1.bf16.msra.mxu0 0
    %1099 = vmatprep.subr.bf16.mxu0 0
    %1100 = vmatpush1.bf16.msra.mxu0 0
    %1101 = vmatprep.subr.bf16.mxu0 0
    %1102 = vmatpush1.bf16.msra.mxu0 0
    %1103 = vmatprep.subr.bf16.mxu0 0
    %1104 = vmatpush1.bf16.msra.mxu0 0
    %1105 = vmatprep.subr.bf16.mxu0 0
    %1106 = vmatpush1.bf16.msra.mxu0 0
    %1107 = vmatprep.subr.bf16.mxu0 0
    %1108 = vmatpush1.bf16.msra.mxu0 0
    %1109 = vmatprep.mubr.bf16.mxu0 0
    %1110 = vmatmul.mubr.bf16.gmra.mrb[0].mxu0 %v1068
    %v1111 = vpop.f32.mrb[0].mxu0
    %v1112 = vadd.f32 0.0, %v1111
    %v1113 = vpop.f32.mrb[0].mxu0
    %v1114 = vadd.f32 0.0, %v1113
    %v1115 = vpop.f32.mrb[0].mxu0
    %v1116 = vpop.f32.mrb[0].mxu0
    %1117 = vdwg.mxu0
    %v1119 = vsel %vm1001, %v1066, 0
    %v1122 = vsel %vm1070, %v893, 0
    %v1125 = vsel %vm1070, %v894, 0
    %1127 = vmatprep.subr.bf16.mxu0 %v1125
    %1128 = vmatpush1.bf16.msra.mxu0 %v1122
    %1129 = vmatprep.subr.bf16.mxu0 0
    %1130 = vmatpush1.bf16.msra.mxu0 0
    %1131 = vmatprep.subr.bf16.mxu0 0
    %1132 = vmatpush1.bf16.msra.mxu0 0
    %1133 = vmatprep.subr.bf16.mxu0 0
    %1134 = vmatpush1.bf16.msra.mxu0 0
    %1135 = vmatprep.subr.bf16.mxu0 0
    %1136 = vmatpush1.bf16.msra.mxu0 0
    %1137 = vmatprep.subr.bf16.mxu0 0
    %1138 = vmatpush1.bf16.msra.mxu0 0
    %1139 = vmatprep.subr.bf16.mxu0 0
    %1140 = vmatpush1.bf16.msra.mxu0 0
    %1141 = vmatprep.subr.bf16.mxu0 0
    %1142 = vmatpush1.bf16.msra.mxu0 0
    %1143 = vmatprep.subr.bf16.mxu0 0
    %1144 = vmatpush1.bf16.msra.mxu0 0
    %1145 = vmatprep.subr.bf16.mxu0 0
    %1146 = vmatpush1.bf16.msra.mxu0 0
    %1147 = vmatprep.subr.bf16.mxu0 0
    %1148 = vmatpush1.bf16.msra.mxu0 0
    %1149 = vmatprep.subr.bf16.mxu0 0
    %1150 = vmatpush1.bf16.msra.mxu0 0
    %1151 = vmatprep.subr.bf16.mxu0 0
    %1152 = vmatpush1.bf16.msra.mxu0 0
    %1153 = vmatprep.subr.bf16.mxu0 0
    %1154 = vmatpush1.bf16.msra.mxu0 0
    %1155 = vmatprep.subr.bf16.mxu0 0
    %1156 = vmatpush1.bf16.msra.mxu0 0
    %1157 = vmatprep.subr.bf16.mxu0 0
    %1158 = vmatpush1.bf16.msra.mxu0 0
    %1159 = vmatprep.mubr.bf16.mxu0 0
    %1160 = vmatmul.mubr.bf16.gmra.mrb[0].mxu0 %v1119
    %v1161 = vpop.f32.mrb[0].mxu0
    %v1162 = vadd.f32 0.0, %v1161
    %v1163 = vpop.f32.mrb[0].mxu0
    %v1164 = vadd.f32 0.0, %v1163
    %v1165 = vpop.f32.mrb[0].mxu0
    %v1166 = vpop.f32.mrb[0].mxu0
    %1167 = vdwg.mxu0
    %v1168 = vadd.f32 %v1061, %v1112
    %v1169 = vadd.f32 %v1062, %v1114
    %v1170 = vadd.f32 %v1063, %v1162
    %v1171 = vadd.f32 %v1064, %v1164
    %1172 = vst [vmem:[#allocation5] sm:$0xff] %v1168
    %1173 = vst [vmem:[#allocation5 + $0x8] sm:$0xff] %v1169
    %1174 = vst [vmem:[#allocation5 + $0x10] sm:$0xff] %v1170
    %1175 = vst [vmem:[#allocation5 + $0x18] sm:$0xff] %v1171
    %1176 = vst.msk [vmem:[#allocation3] sm:$0xff] %vm1044, %v1008
    %1177 = vst.msk [vmem:[#allocation3 + $0x8] sm:$0xff] %vm1044, %v1009
    // Predicated region
    $region50: #{tpu_custom_call.1} parent=1 // pred_check
      %p1178 = pneg %p95
    $region51: #{tpu_custom_call.1} parent=1 // pred_check_branch
      %1180 = sbr.rel (%p1178) target = $region53
    $region52: #{tpu_custom_call.1} parent=1 // pred_region
      %v1181 = vld [vmem:[#allocation5] sm:$0xff]
      %v1182 = vld [vmem:[#allocation5 + $0x8] sm:$0xff]
      %v1183 = vld [vmem:[#allocation5 + $0x10] sm:$0xff]
      %v1184 = vld [vmem:[#allocation5 + $0x18] sm:$0xff]
      %v1185 = vld [vmem:[#allocation4] sm:$0xff]
      %v1186 = vld [vmem:[#allocation4 + $0x8] sm:$0xff]
      %v1187 = vrcp.pop %v1185
      %v1188 = vrcp.pop %v1186
      %1190 = vset.pattern.permute.xlu0 0
      %1191 = vperm.xlu0 %1190, %v1187
      %v1192 = vpop.permute.xlu0 %1191
      %1195 = vset.pattern.permute.xlu0 0
      %1196 = vperm.xlu0 %1195, %v1188
      %v1197 = vpop.permute.xlu0 %1196
      %v1199 = vmul.f32 %v1181, %v1192
      %v1200 = vmul.f32 %v1182, %v1192
      %v1201 = vmul.f32 %v1183, %v1197
      %v1202 = vmul.f32 %v1184, %v1197
      %v1203 = vpack.c.bf16 %v1201, %v1199
      %v1204 = vpack.c.bf16 %v1202, %v1200
      %v1205 = vld [vmem:[#allocation14] sm:$0xff]
      %v1206 = vld [vmem:[#allocation14 + $0x8] sm:$0xff]
      %v1207 = vld [vmem:[#allocation14 + $0x10] sm:$0xff]
      %v1208 = vld [vmem:[#allocation14 + $0x18] sm:$0xff]
      %v1209 = vld [vmem:[#allocation14 + $0x20] sm:$0xff]
      %v1210 = vld [vmem:[#allocation14 + $0x28] sm:$0xff]
      %v1211 = vld [vmem:[#allocation14 + $0x30] sm:$0xff]
      %v1212 = vld [vmem:[#allocation14 + $0x38] sm:$0xff]
      %v1213 = vld [vmem:[#allocation14 + $0x40] sm:$0xff]
      %v1214 = vld [vmem:[#allocation14 + $0x48] sm:$0xff]
      %v1215 = vld [vmem:[#allocation14 + $0x50] sm:$0xff]
      %v1216 = vld [vmem:[#allocation14 + $0x58] sm:$0xff]
      %v1217 = vld [vmem:[#allocation14 + $0x60] sm:$0xff]
      %v1218 = vld [vmem:[#allocation14 + $0x68] sm:$0xff]
      %v1219 = vld [vmem:[#allocation14 + $0x70] sm:$0xff]
      %v1220 = vld [vmem:[#allocation14 + $0x78] sm:$0xff]
      %v1221 = vld [vmem:[#allocation14 + $0x80] sm:$0xff]
      %v1222 = vld [vmem:[#allocation14 + $0x88] sm:$0xff]
      %v1223 = vld [vmem:[#allocation14 + $0x90] sm:$0xff]
      %v1224 = vld [vmem:[#allocation14 + $0x98] sm:$0xff]
      %v1225 = vld [vmem:[#allocation14 + $0xa0] sm:$0xff]
      %v1226 = vld [vmem:[#allocation14 + $0xa8] sm:$0xff]
      %v1227 = vld [vmem:[#allocation14 + $0xb0] sm:$0xff]
      %v1228 = vld [vmem:[#allocation14 + $0xb8] sm:$0xff]
      %v1229 = vld [vmem:[#allocation14 + $0xc0] sm:$0xff]
      %v1230 = vld [vmem:[#allocation14 + $0xc8] sm:$0xff]
      %v1231 = vld [vmem:[#allocation14 + $0xd0] sm:$0xff]
      %v1232 = vld [vmem:[#allocation14 + $0xd8] sm:$0xff]
      %v1233 = vld [vmem:[#allocation14 + $0xe0] sm:$0xff]
      %v1234 = vld [vmem:[#allocation14 + $0xe8] sm:$0xff]
      %v1235 = vld [vmem:[#allocation14 + $0xf0] sm:$0xff]
      %v1236 = vld [vmem:[#allocation14 + $0xf8] sm:$0xff]
      %v1237 = vlaneseq
      %v1238 = vshrl.u32 %v1237, 7
      %v1239 = vsub.s32 3, %v1238
      %v1240 = vrot.slane %v93, %v1239
      %v1241 = vlaneseq
      %v1242 = vshrl.u32 %v1241, 7
      %v1243 = vsub.s32 3, %v1242
      %v1244 = vrot.slane %v94, %v1243
      %v1277 = vunpack.c.l.b16 %v1205
      %v1278 = vunpack.c.h.b16 %v1205
      %v1279 = vunpack.c.l.b16 %v1206
      %v1280 = vunpack.c.h.b16 %v1206
      %v1281 = vunpack.c.l.b16 %v1207
      %v1282 = vunpack.c.h.b16 %v1207
      %v1283 = vunpack.c.l.b16 %v1208
      %v1284 = vunpack.c.h.b16 %v1208
      %v1285 = vunpack.c.l.b16 %v1209
      %v1286 = vunpack.c.h.b16 %v1209
      %v1287 = vunpack.c.l.b16 %v1210
      %v1288 = vunpack.c.h.b16 %v1210
      %v1289 = vunpack.c.l.b16 %v1211
      %v1290 = vunpack.c.h.b16 %v1211
      %v1291 = vunpack.c.l.b16 %v1212
      %v1292 = vunpack.c.h.b16 %v1212
      %v1293 = vunpack.c.l.b16 %v1213
      %v1294 = vunpack.c.h.b16 %v1213
      %v1295 = vunpack.c.l.b16 %v1214
      %v1296 = vunpack.c.h.b16 %v1214
      %v1297 = vunpack.c.l.b16 %v1215
      %v1298 = vunpack.c.h.b16 %v1215
      %v1299 = vunpack.c.l.b16 %v1216
      %v1300 = vunpack.c.h.b16 %v1216
      %v1301 = vunpack.c.l.b16 %v1217
      %v1302 = vunpack.c.h.b16 %v1217
      %v1303 = vunpack.c.l.b16 %v1218
      %v1304 = vunpack.c.h.b16 %v1218
      %v1305 = vunpack.c.l.b16 %v1219
      %v1306 = vunpack.c.h.b16 %v1219
      %v1307 = vunpack.c.l.b16 %v1220
      %v1308 = vunpack.c.h.b16 %v1220
      %v1309 = vunpack.c.l.b16 %v1221
      %v1310 = vunpack.c.h.b16 %v1221
      %v1311 = vunpack.c.l.b16 %v1222
      %v1312 = vunpack.c.h.b16 %v1222
      %v1313 = vunpack.c.l.b16 %v1223
      %v1314 = vunpack.c.h.b16 %v1223
      %v1315 = vunpack.c.l.b16 %v1224
      %v1316 = vunpack.c.h.b16 %v1224
      %v1317 = vunpack.c.l.b16 %v1225
      %v1318 = vunpack.c.h.b16 %v1225
      %v1319 = vunpack.c.l.b16 %v1226
      %v1320 = vunpack.c.h.b16 %v1226
      %v1321 = vunpack.c.l.b16 %v1227
      %v1322 = vunpack.c.h.b16 %v1227
      %v1323 = vunpack.c.l.b16 %v1228
      %v1324 = vunpack.c.h.b16 %v1228
      %v1325 = vunpack.c.l.b16 %v1229
      %v1326 = vunpack.c.h.b16 %v1229
      %v1327 = vunpack.c.l.b16 %v1230
      %v1328 = vunpack.c.h.b16 %v1230
      %v1329 = vunpack.c.l.b16 %v1231
      %v1330 = vunpack.c.h.b16 %v1231
      %v1331 = vunpack.c.l.b16 %v1232
      %v1332 = vunpack.c.h.b16 %v1232
      %v1333 = vunpack.c.l.b16 %v1233
      %v1334 = vunpack.c.h.b16 %v1233
      %v1335 = vunpack.c.l.b16 %v1234
      %v1336 = vunpack.c.h.b16 %v1234
      %v1337 = vunpack.c.l.b16 %v1235
      %v1338 = vunpack.c.h.b16 %v1235
      %v1339 = vunpack.c.l.b16 %v1236
      %v1340 = vunpack.c.h.b16 %v1236
      %v1341 = vpack.c.b16 %v1279, %v1277
      %v1342 = vpack.c.b16 %v1280, %v1278
      %v1343 = vpack.c.b16 %v1283, %v1281
      %v1344 = vpack.c.b16 %v1284, %v1282
      %v1345 = vpack.c.b16 %v1287, %v1285
      %v1346 = vpack.c.b16 %v1288, %v1286
      %v1347 = vpack.c.b16 %v1291, %v1289
      %v1348 = vpack.c.b16 %v1292, %v1290
      %v1349 = vpack.c.b16 %v1295, %v1293
      %v1350 = vpack.c.b16 %v1296, %v1294
      %v1351 = vpack.c.b16 %v1299, %v1297
      %v1352 = vpack.c.b16 %v1300, %v1298
      %v1353 = vpack.c.b16 %v1303, %v1301
      %v1354 = vpack.c.b16 %v1304, %v1302
      %v1355 = vpack.c.b16 %v1307, %v1305
      %v1356 = vpack.c.b16 %v1308, %v1306
      %v1357 = vpack.c.b16 %v1311, %v1309
      %v1358 = vpack.c.b16 %v1312, %v1310
      %v1359 = vpack.c.b16 %v1315, %v1313
      %v1360 = vpack.c.b16 %v1316, %v1314
      %v1361 = vpack.c.b16 %v1319, %v1317
      %v1362 = vpack.c.b16 %v1320, %v1318
      %v1363 = vpack.c.b16 %v1323, %v1321
      %v1364 = vpack.c.b16 %v1324, %v1322
      %v1365 = vpack.c.b16 %v1327, %v1325
      %v1366 = vpack.c.b16 %v1328, %v1326
      %v1367 = vpack.c.b16 %v1331, %v1329
      %v1368 = vpack.c.b16 %v1332, %v1330
      %v1369 = vpack.c.b16 %v1335, %v1333
      %v1370 = vpack.c.b16 %v1336, %v1334
      %v1371 = vpack.c.b16 %v1339, %v1337
      %v1372 = vpack.c.b16 %v1340, %v1338
      %1405 = vmatprep.subr.bf16.mxu0 %v1342
      %1406 = vmatpush1.bf16.msra.mxu0 %v1341
      %1407 = vmatprep.subr.bf16.mxu0 %v1344
      %1408 = vmatpush1.bf16.msra.mxu0 %v1343
      %1409 = vmatprep.subr.bf16.mxu0 %v1346
      %1410 = vmatpush1.bf16.msra.mxu0 %v1345
      %1411 = vmatprep.subr.bf16.mxu0 %v1348
      %1412 = vmatpush1.bf16.msra.mxu0 %v1347
      %1413 = vmatprep.subr.bf16.mxu0 %v1350
      %1414 = vmatpush1.bf16.msra.mxu0 %v1349
      %1415 = vmatprep.subr.bf16.mxu0 %v1352
      %1416 = vmatpush1.bf16.msra.mxu0 %v1351
      %1417 = vmatprep.subr.bf16.mxu0 %v1354
      %1418 = vmatpush1.bf16.msra.mxu0 %v1353
      %1419 = vmatprep.subr.bf16.mxu0 %v1356
      %1420 = vmatpush1.bf16.msra.mxu0 %v1355
      %1421 = vmatprep.subr.bf16.mxu0 %v1358
      %1422 = vmatpush1.bf16.msra.mxu0 %v1357
      %1423 = vmatprep.subr.bf16.mxu0 %v1360
      %1424 = vmatpush1.bf16.msra.mxu0 %v1359
      %1425 = vmatprep.subr.bf16.mxu0 %v1362
      %1426 = vmatpush1.bf16.msra.mxu0 %v1361
      %1427 = vmatprep.subr.bf16.mxu0 %v1364
      %1428 = vmatpush1.bf16.msra.mxu0 %v1363
      %1429 = vmatprep.subr.bf16.mxu0 %v1366
      %1430 = vmatpush1.bf16.msra.mxu0 %v1365
      %1431 = vmatprep.subr.bf16.mxu0 %v1368
      %1432 = vmatpush1.bf16.msra.mxu0 %v1367
      %1433 = vmatprep.subr.bf16.mxu0 %v1370
      %1434 = vmatpush1.bf16.msra.mxu0 %v1369
      %1435 = vmatprep.subr.bf16.mxu0 %v1372
      %1436 = vmatpush1.bf16.msra.mxu0 %v1371
      %1437 = vmatprep.mubr.bf16.mxu0 %v1204
      %1438 = vmatmul.mubr.bf16.gmra.mrb[0].mxu0 %v1203
      %v1439 = vpop.f32.mrb[0].mxu0
      %v1440 = vadd.f32 %v1240, %v1439
      %v1441 = vpop.f32.mrb[0].mxu0
      %v1442 = vadd.f32 %v1244, %v1441
      %v1443 = vpop.f32.mrb[0].mxu0
      %v1444 = vadd.f32 %v1240, %v1443
      %v1445 = vpop.f32.mrb[0].mxu0
      %v1446 = vadd.f32 %v1244, %v1445
      %1447 = vdwg.mxu0
      %1448 = vst [vmem:[#allocation15] sm:$0xff] %v1440
      %1449 = vst [vmem:[#allocation15 + $0x8] sm:$0xff] %v1442
      %1450 = vst [vmem:[#allocation15 + $0x10] sm:$0xff] %v1444
      %1451 = vst [vmem:[#allocation15 + $0x18] sm:$0xff] %v1446
    $region53: #{tpu_custom_call.1} parent=1 // pred_fallthru
      _
    // Predicated region
    $region54: #{tpu_custom_call.1} parent=1 // pred_check
      _
    $region55: #{tpu_custom_call.1} parent=1 // pred_check_branch
      %1453 = sbr.rel (0) target = $region57
    $region56: #{tpu_custom_call.1} parent=1 // pred_region
      %s1455 = ssub.s32 512, 512
      %1456 = vsyncadd [#allocation8], %s1455
      %s1457 = sshll.u32 [#allocation15], 4
      %s1458 = int_to_ptr.vmem [resolvable:$true] %s1457
      %1463 = dma.vmem_to_hbm [thread:$0]  %s1458, 512, %s6, [#allocation8], 256, 256, 16
    $region57: #{tpu_custom_call.1} parent=1 // pred_fallthru
      _
    // Predicated region
    $region58: #{tpu_custom_call.1} parent=1 // pred_check
      _
    $region59: #{tpu_custom_call.1} parent=1 // pred_check_branch
      %1465 = sbr.rel (0) target = $region61
    $region60: #{tpu_custom_call.1} parent=1 // pred_region
      %1466 = dma.done [#allocation8], 512
    $region61: #{tpu_custom_call.1} parent=1 // pred_fallthru
      _
    %1467 = vsyncpa [#allocation7], 1
    %1468 = vsyncpa [#allocation10], 1
    %1469 = vsyncpa [#allocation13], 1
    %1470 = vsyncpa [#allocation8], 1

</llo_original>
